<compile_context>
chip_gen: v5e
topology: v5e:2x2
jax: 0.10.0
libtpu: 0.0.40
codegen_flags: <defaults>
</compile_context>

<pallas_src>
import functools
import math

import jax
import jax.numpy as jnp
from jax.experimental import pallas as pl
from jax.experimental.pallas import tpu as pltpu


# ---------------------------------------------------------------------------
# PositionEmbeddingSine (normalize=True, scale=2*pi). Pure elementwise glue,
# computed once in plain JAX (batch-invariant when mask is None).
# ---------------------------------------------------------------------------
def position_embedding_sine(B, H, W, num_pos_feats, temperature=10000.0,
                            scale=2.0 * math.pi):
    not_mask = jnp.ones((B, H, W), jnp.float32)
    y_embed = jnp.cumsum(not_mask, axis=1)
    x_embed = jnp.cumsum(not_mask, axis=2)
    eps = 1e-6
    y_embed = y_embed / (y_embed[:, -1:, :] + eps) * scale
    x_embed = x_embed / (x_embed[:, :, -1:] + eps) * scale
    dim_t = jnp.arange(num_pos_feats, dtype=jnp.float32)
    dim_t = temperature ** (2.0 * jnp.floor(dim_t / 2.0) / num_pos_feats)
    pos_x = x_embed[:, :, :, None] / dim_t
    pos_y = y_embed[:, :, :, None] / dim_t
    pos_x = jnp.stack((jnp.sin(pos_x[..., 0::2]), jnp.cos(pos_x[..., 1::2])),
                      axis=4).reshape(B, H, W, num_pos_feats)
    pos_y = jnp.stack((jnp.sin(pos_y[..., 0::2]), jnp.cos(pos_y[..., 1::2])),
                      axis=4).reshape(B, H, W, num_pos_feats)
    return jnp.concatenate((pos_y, pos_x), axis=3)  # [B, H, W, 2*num_pos_feats]


# ---------------------------------------------------------------------------
# Pallas kernel. One grid step handles (batch b, key/value tile s) with an
# online-softmax accumulator; the epilogue (fused out_proj+MLP, residual, LN)
# runs on the last S tile of each batch.
# ---------------------------------------------------------------------------
def _cdt_kernel(nhead, compute_dtype,
                q_ref, tgt_ref, mem_ref, pos_ref,
                wk_ref, bk_ref, wv_ref, bv_ref,
                wf_ref, bf_ref, gamma_ref, beta_ref,
                out_ref, m_sc, l_sc, acc_sc):
    s_idx = pl.program_id(1)

    @pl.when(s_idx == 0)
    def _init():
        m_sc[...] = jnp.full_like(m_sc, -jnp.inf)
        l_sc[...] = jnp.zeros_like(l_sc)
        acc_sc[...] = jnp.zeros_like(acc_sc)

    mem = mem_ref[0]                     # [C, St] compute_dtype (value / key source)
    km = mem + pos_ref[...]              # key = memory + pos (query_pos is None)

    C, St = km.shape
    hd = C // nhead

    # K/V projections on the channels-first tile: one full-width MXU matmul each,
    # f32 accumulation, bias broadcast along lanes.
    k = (jnp.dot(wk_ref[...], km, preferred_element_type=jnp.float32)
         + bk_ref[...])                  # [C, St] f32
    v = (jnp.dot(wv_ref[...], mem, preferred_element_type=jnp.float32)
         + bv_ref[...])                  # [C, St] f32
    kh = k.astype(compute_dtype).reshape(nhead, hd, St)   # head split = free view of C
    vh = v.astype(compute_dtype).reshape(nhead, hd, St)

    q = q_ref[...]                       # [nhead, T, hd], pre-scaled, compute_dtype

    # scores, batched over heads: [nhead, T, St]
    s = jax.lax.dot_general(q, kh, (((2,), (1,)), ((0,), (0,))),
                            preferred_element_type=jnp.float32)

    # --- online softmax across S tiles ---
    m_prev = m_sc[...]
    m_new = jnp.maximum(m_prev, jnp.max(s, axis=-1, keepdims=True))
    alpha = jnp.exp(m_prev - m_new)
    p = jnp.exp(s - m_new)
    l_sc[...] = alpha * l_sc[...] + jnp.sum(p, axis=-1, keepdims=True)
    pv = jax.lax.dot_general(p.astype(compute_dtype), vh,
                             (((2,), (2,)), ((0,), (0,))),
                             preferred_element_type=jnp.float32)   # [nhead, T, hd]
    acc_sc[...] = alpha * acc_sc[...] + pv
    m_sc[...] = m_new

    @pl.when(s_idx == pl.num_programs(1) - 1)
    def _finalize():
        # normalize attention output (EUP approx reciprocal; flag if precision-critical)
        o = acc_sc[...] * pl.reciprocal(l_sc[...], approx=True)     # [nhead, T, hd]
        # fused out_proj + MLP: concat_h(o_h) @ Wf + bf, expressed as a batched
        # matmul over heads followed by a cheap sum over the head axis.
        y = jax.lax.dot_general(o.astype(compute_dtype), wf_ref[...],
                                (((2,), (1,)), ((0,), (0,))),
                                preferred_element_type=jnp.float32)  # [nhead, T, C]
        x = tgt_ref[...] + jnp.sum(y, axis=0) + bf_ref[...]          # [T, C]
        mu = jnp.mean(x, axis=-1, keepdims=True)
        var = jnp.mean((x - mu) * (x - mu), axis=-1, keepdims=True)
        out_ref[0] = ((x - mu) * jax.lax.rsqrt(var + 1e-5) * gamma_ref[...]
                      + beta_ref[...])


def content_dependent_transfer(img_feat, text_classifier, params, nhead, *,
                               compute_dtype=jnp.bfloat16, s_tile=None):
    B, C, H, W = img_feat.shape
    T = text_classifier.shape[0]
    S = H * W
    assert C % nhead == 0, "d_model must divide by nhead"
    assert C % 128 == 0, "d_model should be a multiple of 128 for lane-dense blocks"
    hd = C // nhead

    if s_tile is None:
        s_tile = S
        for cand in (2048, 1024, 512, 256, 128):
            if S % cand == 0:
                s_tile = cand
                break
    assert S % s_tile == 0 and s_tile % 128 == 0, "s_tile must divide S, multiple of 128"
    n_s = S // s_tile

    # Channels-first memory: a FREE reshape of NCHW img_feat (no HBM transpose).
    # bf16 halves the per-tile DMA + VMEM block. (In production the backbone should
    # emit compute_dtype directly so this cast fuses away.)
    mem = img_feat.reshape(B, C, S).astype(compute_dtype)

    # Batch-invariant sine positional embedding, channels-first [C, S], bf16.
    pos = position_embedding_sine(1, H, W, C // 2).reshape(S, C).T.astype(compute_dtype)

    Wq, Wk, Wv = jnp.split(params["in_proj_weight"], 3, axis=0)    # [C, C] each
    bq, bk, bv = jnp.split(params["in_proj_bias"], 3, axis=0)      # [C] each

    # Batch-invariant Q projection hoisted out of the grid, pre-scaled by 1/sqrt(hd)
    # (PyTorch MHA scales q), in per-head layout [nhead, T, hd].
    q = (text_classifier.astype(jnp.float32) @ Wq.T + bq) * (1.0 / math.sqrt(hd))
    q_heads = q.reshape(T, nhead, hd).transpose(1, 0, 2).astype(compute_dtype)

    # Fold out_proj and the MLP linear offline (exact: no activation between them).
    Wo, bo = params["out_proj_weight"], params["out_proj_bias"]
    Wm, bm = params["mlp_weight"], params["mlp_bias"]
    wf = (Wm @ Wo).T.reshape(nhead, hd, C).astype(compute_dtype)   # rows = concat-head dim
    bf = (bo @ Wm.T + bm).reshape(1, C).astype(jnp.float32)

    col = lambda b_: b_.reshape(C, 1).astype(jnp.float32)
    row = lambda b_: b_.reshape(1, C).astype(jnp.float32)

    inputs = [
        q_heads,                              # [nhead, T, hd]
        text_classifier.astype(jnp.float32),  # [T, C]
        mem,                                  # [B, C, S]
        pos,                                  # [C, S]
        Wk.astype(compute_dtype), col(bk),
        Wv.astype(compute_dtype), col(bv),
        wf, bf,
        row(params["ln_weight"]), row(params["ln_bias"]),
    ]

    def const_spec(x):
        n = x.ndim
        return pl.BlockSpec(x.shape, lambda b, s, _n=n: (0,) * _n)

    in_specs = [const_spec(q_heads),
                const_spec(inputs[1]),
                pl.BlockSpec((1, C, s_tile), lambda b, s: (b, 0, s)),
                pl.BlockSpec((C, s_tile), lambda b, s: (0, s))]
    in_specs += [const_spec(x) for x in inputs[4:]]

    # Explicit VMEM budget (review: v7x's 64 MiB physical / 32 MiB default scoped limit).
    cd = jnp.dtype(compute_dtype).itemsize
    per_buf = (2 * C * s_tile * cd          # mem + pos tiles
               + nhead * T * hd * cd        # q_heads
               + 2 * T * C * 4              # tgt residual + output tile
               + 3 * C * C * cd             # Wk, Wv, Wf
               + 5 * C * 4)                 # bk, bv, bf, gamma, beta
    scratch_b = (2 * nhead * T + nhead * T * hd) * 4
    temps = (2 * C * s_tile * (4 + cd)      # k/v in f32 + bf16
             + 2 * nhead * T * s_tile * 4   # scores / probs
             + nhead * T * C * 4)           # epilogue
    vmem_limit = int(min(64 << 20, max(32 << 20, 2 * (2 * per_buf + scratch_b + temps))))

    kernel = functools.partial(_cdt_kernel, nhead, compute_dtype)
    out = pl.pallas_call(
        kernel,
        out_shape=jax.ShapeDtypeStruct((B, T, C), jnp.float32),
        grid=(B, n_s),
        in_specs=in_specs,
        out_specs=pl.BlockSpec((1, T, C), lambda b, s: (b, 0, 0)),
        scratch_shapes=[pltpu.VMEM((nhead, T, 1), jnp.float32),   # running max
                        pltpu.VMEM((nhead, T, 1), jnp.float32),   # running denom
                        pltpu.VMEM((nhead, T, hd), jnp.float32)], # running PV accumulator
        compiler_params=pltpu.CompilerParams(
            dimension_semantics=("parallel", "arbitrary"),
            vmem_limit_bytes=vmem_limit),
    )(*inputs)
    return out


# ---------------------------------------------------------------------------
# Pure-JAX references. matmul_dtype=bf16 + fuse_epilogue=True mirrors the
# kernel's precision choices (bf16 operands / f32 accumulation, bf16 mem+pos,
# f32 hoisted Q, fused Wo/Wm) for a tight check; the default is exact f32.
# ---------------------------------------------------------------------------
def reference_forward(img_feat, text_classifier, params, nhead,
                      matmul_dtype=jnp.float32, fuse_epilogue=False):
    B, C, H, W = img_feat.shape
    T = text_classifier.shape[0]
    S = H * W
    hd = C // nhead
    pos = position_embedding_sine(B, H, W, C // 2).reshape(B, S, C)
    mem = img_feat.reshape(B, C, S).transpose(0, 2, 1)
    if matmul_dtype != jnp.float32:            # mirror the kernel's bf16 mem/pos inputs
        mem = mem.astype(matmul_dtype).astype(jnp.float32)
        pos = pos.astype(matmul_dtype).astype(jnp.float32)
    Wq, Wk, Wv = jnp.split(params["in_proj_weight"], 3, axis=0)
    bq, bk, bv = jnp.split(params["in_proj_bias"], 3, axis=0)
    Wo, bo = params["out_proj_weight"], params["out_proj_bias"]
    Wm, bm = params["mlp_weight"], params["mlp_bias"]
    g, be = params["ln_weight"], params["ln_bias"]

    def mm(a, b):
        return jnp.dot(a.astype(matmul_dtype), b.astype(matmul_dtype),
                       preferred_element_type=jnp.float32)

    if fuse_epilogue:
        Wf = (Wm @ Wo).T
        bfv = bo @ Wm.T + bm

    outs = []
    for b in range(B):
        tgt = text_classifier
        q = (tgt @ Wq.T + bq) * (1.0 / math.sqrt(hd))   # f32, as in the kernel wrapper
        k = mm(mem[b] + pos[b], Wk.T) + bk
        v = mm(mem[b], Wv.T) + bv
        qh = q.reshape(T, nhead, hd).transpose(1, 0, 2)
        kh = k.reshape(S, nhead, hd).transpose(1, 0, 2)
        vh = v.reshape(S, nhead, hd).transpose(1, 0, 2)
        s = jnp.einsum('htd,hsd->hts', qh.astype(matmul_dtype),
                       kh.astype(matmul_dtype), preferred_element_type=jnp.float32)
        p = jax.nn.softmax(s, axis=-1)
        o = jnp.einsum('hts,hsd->htd', p.astype(matmul_dtype),
                       vh.astype(matmul_dtype), preferred_element_type=jnp.float32)
        o = o.transpose(1, 0, 2).reshape(T, C)
        if fuse_epilogue:
            y = mm(o, Wf) + bfv
        else:
            y = mm(mm(o, Wo.T) + bo, Wm.T) + bm
        x = tgt + y
        mu = x.mean(-1, keepdims=True)
        var = ((x - mu) ** 2).mean(-1, keepdims=True)
        outs.append((x - mu) / jnp.sqrt(var + 1e-5) * g + be)
    return jnp.stack(outs)


if __name__ == "__main__":
    # Small but lane-friendly shapes: d_model multiple of 128 (as for real CLIP
    # embedding dims); s_tile=128 exercises the 2-step online-softmax S-tiling path.
    B, C, H, W = 2, 128, 16, 16    # d_model = 128, S = 256
    T = 16                         # number of text-classifier rows
    nhead = 4                      # head_dim = 32

    key = jax.random.PRNGKey(0)
    ks = jax.random.split(key, 8)
    params = {
        "in_proj_weight":  jax.random.normal(ks[0], (3 * C, C), jnp.float32) / math.sqrt(C),
        "in_proj_bias":    jax.random.normal(ks[1], (3 * C,), jnp.float32) * 0.02,
        "out_proj_weight": jax.random.normal(ks[2], (C, C), jnp.float32) / math.sqrt(C),
        "out_proj_bias":   jax.random.normal(ks[3], (C,), jnp.float32) * 0.02,
        "mlp_weight":      jax.random.normal(ks[4], (C, C), jnp.float32) / math.sqrt(C),
        "mlp_bias":        jax.random.normal(ks[5], (C,), jnp.float32) * 0.02,
        "ln_weight":       jnp.ones((C,), jnp.float32),
        "ln_bias":         jnp.zeros((C,), jnp.float32),
    }
    img_feat = jax.random.normal(ks[6], (B, C, H, W), jnp.float32)
    text_classifier = jax.random.normal(ks[7], (T, C), jnp.float32)

    out = jax.block_until_ready(
        content_dependent_transfer(img_feat, text_classifier, params, nhead, s_tile=128))
    assert out.shape == (B, T, C), out.shape

    # Tight check vs a precision-matched reference (bf16 operands, bf16 mem/pos,
    # fused epilogue); residual difference = approx reciprocal + online-softmax order.
    ref_matched = reference_forward(img_feat, text_classifier, params, nhead,
                                    matmul_dtype=jnp.bfloat16, fuse_epilogue=True)
    err_matched = float(jnp.max(jnp.abs(out - ref_matched)))
    assert err_matched < 2e-2, f"mismatch vs precision-matched reference: {err_matched}"

    # Coarse sanity bound vs the exact f32, unfused reference (bounds bf16 rounding).
    ref_f32 = reference_forward(img_feat, text_classifier, params, nhead)
    err_f32 = float(jnp.max(jnp.abs(out - ref_f32)))
    assert err_f32 < 1.5e-1, f"mismatch vs f32 reference: {err_f32}"

    print("KERNEL_OK")
</pallas_src>

<mosaic_0001>
module attributes {stable_mosaic.version = 11 : i64} {
  func.func @_cdt_kernel(%arg0: i32, %arg1: i32, %arg2: memref<4x16x32xbf16, #tpu.memory_space<vmem>>, %arg3: memref<16x128xf32, #tpu.memory_space<vmem>>, %arg4: memref<1x128x128xbf16, #tpu.memory_space<vmem>>, %arg5: memref<128x128xbf16, #tpu.memory_space<vmem>>, %arg6: memref<128x128xbf16, #tpu.memory_space<vmem>>, %arg7: memref<128x1xf32, #tpu.memory_space<vmem>>, %arg8: memref<128x128xbf16, #tpu.memory_space<vmem>>, %arg9: memref<128x1xf32, #tpu.memory_space<vmem>>, %arg10: memref<4x32x128xbf16, #tpu.memory_space<vmem>>, %arg11: memref<1x128xf32, #tpu.memory_space<vmem>>, %arg12: memref<1x128xf32, #tpu.memory_space<vmem>>, %arg13: memref<1x128xf32, #tpu.memory_space<vmem>>, %arg14: memref<1x16x128xf32, #tpu.memory_space<vmem>>, %arg15: memref<4x16x1xf32, #tpu.memory_space<vmem>>, %arg16: memref<4x16x1xf32, #tpu.memory_space<vmem>>, %arg17: memref<4x16x32xf32, #tpu.memory_space<vmem>>) attributes {dimension_semantics = [#tpu.dimension_semantics<parallel>, #tpu.dimension_semantics<arbitrary>], iteration_bounds = array<i64: 2, 2>, scalar_prefetch = 0 : i64, scratch_operands = 3 : i64, tpu.core_type = #tpu.core_type<tc>, window_params = [{pipeline_mode = #tpu.pipeline_mode<synchronous>, transform_indices = @transform_0, window_bounds = array<i64: 4, 16, 32>}, {pipeline_mode = #tpu.pipeline_mode<synchronous>, transform_indices = @transform_1, window_bounds = array<i64: 16, 128>}, {transform_indices = @transform_2, window_bounds = array<i64: 1, 128, 128>}, {transform_indices = @transform_3, window_bounds = array<i64: 128, 128>}, {pipeline_mode = #tpu.pipeline_mode<synchronous>, transform_indices = @transform_4, window_bounds = array<i64: 128, 128>}, {pipeline_mode = #tpu.pipeline_mode<synchronous>, transform_indices = @transform_5, window_bounds = array<i64: 128, 1>}, {pipeline_mode = #tpu.pipeline_mode<synchronous>, transform_indices = @transform_6, window_bounds = array<i64: 128, 128>}, {pipeline_mode = #tpu.pipeline_mode<synchronous>, transform_indices = @transform_7, window_bounds = array<i64: 128, 1>}, {pipeline_mode = #tpu.pipeline_mode<synchronous>, transform_indices = @transform_8, window_bounds = array<i64: 4, 32, 128>}, {pipeline_mode = #tpu.pipeline_mode<synchronous>, transform_indices = @transform_9, window_bounds = array<i64: 1, 128>}, {pipeline_mode = #tpu.pipeline_mode<synchronous>, transform_indices = @transform_10, window_bounds = array<i64: 1, 128>}, {pipeline_mode = #tpu.pipeline_mode<synchronous>, transform_indices = @transform_11, window_bounds = array<i64: 1, 128>}, {transform_indices = @transform_12, window_bounds = array<i64: 1, 16, 128>}]} {
    %c0_i32 = arith.constant 0 : i32
    %0 = arith.cmpi eq, %arg1, %c0_i32 : i32
    %1 = arith.extui %0 : i1 to i32
    %c0_i32_0 = arith.constant 0 : i32
    %2 = arith.cmpi ne, %1, %c0_i32_0 : i32
    scf.if %2 {
      %cst_40 = arith.constant 0xFF800000 : f32
      %49 = vector.broadcast %cst_40 : f32 to vector<4x16x1xf32>
      %c0_41 = arith.constant 0 : index
      %c0_42 = arith.constant 0 : index
      %c0_43 = arith.constant 0 : index
      %50 = vector.load %arg15[%c0_41, %c0_42, %c0_43] : memref<4x16x1xf32, #tpu.memory_space<vmem>>, vector<4x16x1xf32>
      tpu.vector_store %arg15[%c0_41, %c0_42, %c0_43], %49 {strides = array<i32>} : memref<4x16x1xf32, #tpu.memory_space<vmem>>, vector<4x16x1xf32>,
      %cst_44 = arith.constant 0.000000e+00 : f32
      %51 = vector.broadcast %cst_44 : f32 to vector<4x16x1xf32>
      %c0_45 = arith.constant 0 : index
      %c0_46 = arith.constant 0 : index
      %c0_47 = arith.constant 0 : index
      %52 = vector.load %arg16[%c0_45, %c0_46, %c0_47] : memref<4x16x1xf32, #tpu.memory_space<vmem>>, vector<4x16x1xf32>
      tpu.vector_store %arg16[%c0_45, %c0_46, %c0_47], %51 {strides = array<i32>} : memref<4x16x1xf32, #tpu.memory_space<vmem>>, vector<4x16x1xf32>,
      %cst_48 = arith.constant 0.000000e+00 : f32
      %53 = vector.broadcast %cst_48 : f32 to vector<4x16x32xf32>
      %c0_49 = arith.constant 0 : index
      %c0_50 = arith.constant 0 : index
      %c0_51 = arith.constant 0 : index
      %54 = vector.load %arg17[%c0_49, %c0_50, %c0_51] : memref<4x16x32xf32, #tpu.memory_space<vmem>>, vector<4x16x32xf32>
      tpu.vector_store %arg17[%c0_49, %c0_50, %c0_51], %53 {strides = array<i32>} : memref<4x16x32xf32, #tpu.memory_space<vmem>>, vector<4x16x32xf32>,
    } else {
    }
    %c0 = arith.constant 0 : index
    %c0_1 = arith.constant 0 : index
    %c0_2 = arith.constant 0 : index
    %3 = vector.load %arg4[%c0, %c0_1, %c0_2] : memref<1x128x128xbf16, #tpu.memory_space<vmem>>, vector<1x128x128xbf16>
    %4 = vector.shape_cast %3 : vector<1x128x128xbf16> to vector<128x128xbf16>
    %c0_3 = arith.constant 0 : index
    %c0_4 = arith.constant 0 : index
    %5 = vector.load %arg5[%c0_3, %c0_4] : memref<128x128xbf16, #tpu.memory_space<vmem>>, vector<128x128xbf16>
    %6 = arith.addf %4, %5 : vector<128x128xbf16>
    %c0_5 = arith.constant 0 : index
    %c0_6 = arith.constant 0 : index
    %7 = vector.load %arg6[%c0_5, %c0_6] : memref<128x128xbf16, #tpu.memory_space<vmem>>, vector<128x128xbf16>
    %cst = arith.constant dense<0.000000e+00> : vector<128x128xf32>
    %8 = tpu.matmul %7, %6, %cst {dimension_numbers = #tpu.dot_dimension_numbers<[1], [0], [0], [1], [0, 0, 1, 1], [], []>} : vector<128x128xbf16>, vector<128x128xbf16>, vector<128x128xf32> -> vector<128x128xf32>
    %c0_7 = arith.constant 0 : index
    %c0_8 = arith.constant 0 : index
    %9 = vector.load %arg7[%c0_7, %c0_8] : memref<128x1xf32, #tpu.memory_space<vmem>>, vector<128x1xf32>
    %10 = vector.broadcast %9 : vector<128x1xf32> to vector<128x128xf32>
    %11 = arith.addf %8, %10 : vector<128x128xf32>
    %c0_9 = arith.constant 0 : index
    %c0_10 = arith.constant 0 : index
    %12 = vector.load %arg8[%c0_9, %c0_10] : memref<128x128xbf16, #tpu.memory_space<vmem>>, vector<128x128xbf16>
    %cst_11 = arith.constant dense<0.000000e+00> : vector<128x128xf32>
    %13 = tpu.matmul %12, %4, %cst_11 {dimension_numbers = #tpu.dot_dimension_numbers<[1], [0], [0], [1], [0, 0, 1, 1], [], []>} : vector<128x128xbf16>, vector<128x128xbf16>, vector<128x128xf32> -> vector<128x128xf32>
    %c0_12 = arith.constant 0 : index
    %c0_13 = arith.constant 0 : index
    %14 = vector.load %arg9[%c0_12, %c0_13] : memref<128x1xf32, #tpu.memory_space<vmem>>, vector<128x1xf32>
    %15 = vector.broadcast %14 : vector<128x1xf32> to vector<128x128xf32>
    %16 = arith.addf %13, %15 : vector<128x128xf32>
    %17 = arith.truncf %11 : vector<128x128xf32> to vector<128x128xbf16>
    %18 = vector.shape_cast %17 : vector<128x128xbf16> to vector<4x32x128xbf16>
    %19 = arith.truncf %16 : vector<128x128xf32> to vector<128x128xbf16>
    %20 = vector.shape_cast %19 : vector<128x128xbf16> to vector<4x32x128xbf16>
    %c0_14 = arith.constant 0 : index
    %c0_15 = arith.constant 0 : index
    %c0_16 = arith.constant 0 : index
    %21 = vector.load %arg2[%c0_14, %c0_15, %c0_16] : memref<4x16x32xbf16, #tpu.memory_space<vmem>>, vector<4x16x32xbf16>
    %cst_17 = arith.constant dense<0.000000e+00> : vector<4x16x128xf32>
    %22 = tpu.matmul %21, %18, %cst_17 {dimension_numbers = #tpu.dot_dimension_numbers<[2], [1], [1], [2], [0, 0, 0, 1, 1, 2], [0], [0]>} : vector<4x16x32xbf16>, vector<4x32x128xbf16>, vector<4x16x128xf32> -> vector<4x16x128xf32>
    %c0_18 = arith.constant 0 : index
    %c0_19 = arith.constant 0 : index
    %c0_20 = arith.constant 0 : index
    %23 = vector.load %arg15[%c0_18, %c0_19, %c0_20] : memref<4x16x1xf32, #tpu.memory_space<vmem>>, vector<4x16x1xf32>
    %cst_21 = arith.constant dense<0xFF800000> : vector<4x16xf32>
    %24 = vector.multi_reduction <maximumf>, %22, %cst_21 [2] : vector<4x16x128xf32> to vector<4x16xf32>
    %25 = vector.shape_cast %24 : vector<4x16xf32> to vector<4x16x1xf32>
    %26 = arith.maximumf %23, %25 : vector<4x16x1xf32>
    %27 = arith.subf %23, %26 : vector<4x16x1xf32>
    %28 = math.exp %27 : vector<4x16x1xf32>
    %29 = vector.broadcast %26 : vector<4x16x1xf32> to vector<4x16x128xf32>
    %30 = arith.subf %22, %29 : vector<4x16x128xf32>
    %31 = math.exp %30 : vector<4x16x128xf32>
    %c0_22 = arith.constant 0 : index
    %c0_23 = arith.constant 0 : index
    %c0_24 = arith.constant 0 : index
    %32 = vector.load %arg16[%c0_22, %c0_23, %c0_24] : memref<4x16x1xf32, #tpu.memory_space<vmem>>, vector<4x16x1xf32>
    %33 = arith.mulf %28, %32 : vector<4x16x1xf32>
    %cst_25 = arith.constant dense<0.000000e+00> : vector<4x16xf32>
    %34 = vector.multi_reduction <add>, %31, %cst_25 [2] : vector<4x16x128xf32> to vector<4x16xf32>
    %35 = vector.shape_cast %34 : vector<4x16xf32> to vector<4x16x1xf32>
    %36 = arith.addf %33, %35 : vector<4x16x1xf32>
    %c0_26 = arith.constant 0 : index
    %c0_27 = arith.constant 0 : index
    %c0_28 = arith.constant 0 : index
    %37 = vector.load %arg16[%c0_26, %c0_27, %c0_28] : memref<4x16x1xf32, #tpu.memory_space<vmem>>, vector<4x16x1xf32>
    tpu.vector_store %arg16[%c0_26, %c0_27, %c0_28], %36 {strides = array<i32>} : memref<4x16x1xf32, #tpu.memory_space<vmem>>, vector<4x16x1xf32>,
    %38 = arith.truncf %31 : vector<4x16x128xf32> to vector<4x16x128xbf16>
    %cst_29 = arith.constant dense<0.000000e+00> : vector<4x16x32xf32>
    %39 = tpu.matmul %38, %20, %cst_29 {dimension_numbers = #tpu.dot_dimension_numbers<[2], [2], [1], [1], [0, 0, 0, 1, 1, 1], [0], [0]>} : vector<4x16x128xbf16>, vector<4x32x128xbf16>, vector<4x16x32xf32> -> vector<4x16x32xf32>
    %c0_30 = arith.constant 0 : index
    %c0_31 = arith.constant 0 : index
    %c0_32 = arith.constant 0 : index
    %40 = vector.load %arg17[%c0_30, %c0_31, %c0_32] : memref<4x16x32xf32, #tpu.memory_space<vmem>>, vector<4x16x32xf32>
    %41 = vector.broadcast %28 : vector<4x16x1xf32> to vector<4x16x32xf32>
    %42 = arith.mulf %41, %40 : vector<4x16x32xf32>
    %43 = arith.addf %42, %39 : vector<4x16x32xf32>
    %c0_33 = arith.constant 0 : index
    %c0_34 = arith.constant 0 : index
    %c0_35 = arith.constant 0 : index
    %44 = vector.load %arg17[%c0_33, %c0_34, %c0_35] : memref<4x16x32xf32, #tpu.memory_space<vmem>>, vector<4x16x32xf32>
    tpu.vector_store %arg17[%c0_33, %c0_34, %c0_35], %43 {strides = array<i32>} : memref<4x16x32xf32, #tpu.memory_space<vmem>>, vector<4x16x32xf32>,
    %c0_36 = arith.constant 0 : index
    %c0_37 = arith.constant 0 : index
    %c0_38 = arith.constant 0 : index
    %45 = vector.load %arg15[%c0_36, %c0_37, %c0_38] : memref<4x16x1xf32, #tpu.memory_space<vmem>>, vector<4x16x1xf32>
    tpu.vector_store %arg15[%c0_36, %c0_37, %c0_38], %26 {strides = array<i32>} : memref<4x16x1xf32, #tpu.memory_space<vmem>>, vector<4x16x1xf32>,
    %c1_i32 = arith.constant 1 : i32
    %46 = arith.cmpi eq, %arg1, %c1_i32 : i32
    %47 = arith.extui %46 : i1 to i32
    %c0_i32_39 = arith.constant 0 : i32
    %48 = arith.cmpi ne, %47, %c0_i32_39 : i32
    scf.if %48 {
      %c0_40 = arith.constant 0 : index
      %c0_41 = arith.constant 0 : index
      %c0_42 = arith.constant 0 : index
      %49 = vector.load %arg17[%c0_40, %c0_41, %c0_42] : memref<4x16x32xf32, #tpu.memory_space<vmem>>, vector<4x16x32xf32>
      %c0_43 = arith.constant 0 : index
      %c0_44 = arith.constant 0 : index
      %c0_45 = arith.constant 0 : index
      %50 = vector.load %arg16[%c0_43, %c0_44, %c0_45] : memref<4x16x1xf32, #tpu.memory_space<vmem>>, vector<4x16x1xf32>
      %51 = tpu.reciprocal %50 {approx = true} : vector<4x16x1xf32> -> vector<4x16x1xf32>
      %52 = vector.broadcast %51 : vector<4x16x1xf32> to vector<4x16x32xf32>
      %53 = arith.mulf %49, %52 : vector<4x16x32xf32>
      %54 = arith.truncf %53 : vector<4x16x32xf32> to vector<4x16x32xbf16>
      %c0_46 = arith.constant 0 : index
      %c0_47 = arith.constant 0 : index
      %c0_48 = arith.constant 0 : index
      %55 = vector.load %arg10[%c0_46, %c0_47, %c0_48] : memref<4x32x128xbf16, #tpu.memory_space<vmem>>, vector<4x32x128xbf16>
      %cst_49 = arith.constant dense<0.000000e+00> : vector<4x16x128xf32>
      %56 = tpu.matmul %54, %55, %cst_49 {dimension_numbers = #tpu.dot_dimension_numbers<[2], [1], [1], [2], [0, 0, 0, 1, 1, 2], [0], [0]>} : vector<4x16x32xbf16>, vector<4x32x128xbf16>, vector<4x16x128xf32> -> vector<4x16x128xf32>
      %c0_50 = arith.constant 0 : index
      %c0_51 = arith.constant 0 : index
      %57 = vector.load %arg3[%c0_50, %c0_51] : memref<16x128xf32, #tpu.memory_space<vmem>>, vector<16x128xf32>
      %cst_52 = arith.constant dense<0.000000e+00> : vector<16x128xf32>
      %58 = vector.multi_reduction <add>, %56, %cst_52 [0] : vector<4x16x128xf32> to vector<16x128xf32>
      %59 = arith.addf %57, %58 : vector<16x128xf32>
      %c0_53 = arith.constant 0 : index
      %c0_54 = arith.constant 0 : index
      %60 = vector.load %arg11[%c0_53, %c0_54] : memref<1x128xf32, #tpu.memory_space<vmem>>, vector<1x128xf32>
      %61 = vector.broadcast %60 : vector<1x128xf32> to vector<16x128xf32>
      %62 = arith.addf %59, %61 : vector<16x128xf32>
      %cst_55 = arith.constant dense<0.000000e+00> : vector<16xf32>
      %63 = vector.multi_reduction <add>, %62, %cst_55 [1] : vector<16x128xf32> to vector<16xf32>
      %64 = vector.shape_cast %63 : vector<16xf32> to vector<16x1xf32>
      %cst_56 = arith.constant 1.280000e+02 : f32
      %65 = vector.broadcast %cst_56 : f32 to vector<16x1xf32>
      %66 = arith.divf %64, %65 : vector<16x1xf32>
      %67 = vector.broadcast %66 : vector<16x1xf32> to vector<16x128xf32>
      %68 = arith.subf %62, %67 : vector<16x128xf32>
      %69 = vector.broadcast %66 : vector<16x1xf32> to vector<16x128xf32>
      %70 = arith.subf %62, %69 : vector<16x128xf32>
      %71 = arith.mulf %68, %70 : vector<16x128xf32>
      %cst_57 = arith.constant dense<0.000000e+00> : vector<16xf32>
      %72 = vector.multi_reduction <add>, %71, %cst_57 [1] : vector<16x128xf32> to vector<16xf32>
      %73 = vector.shape_cast %72 : vector<16xf32> to vector<16x1xf32>
      %cst_58 = arith.constant 1.280000e+02 : f32
      %74 = vector.broadcast %cst_58 : f32 to vector<16x1xf32>
      %75 = arith.divf %73, %74 : vector<16x1xf32>
      %76 = vector.broadcast %66 : vector<16x1xf32> to vector<16x128xf32>
      %77 = arith.subf %62, %76 : vector<16x128xf32>
      %cst_59 = arith.constant 9.99999974E-6 : f32
      %78 = vector.broadcast %cst_59 : f32 to vector<16x1xf32>
      %79 = arith.addf %75, %78 : vector<16x1xf32>
      %80 = math.rsqrt %79 : vector<16x1xf32>
      %81 = vector.broadcast %80 : vector<16x1xf32> to vector<16x128xf32>
      %82 = arith.mulf %77, %81 : vector<16x128xf32>
      %c0_60 = arith.constant 0 : index
      %c0_61 = arith.constant 0 : index
      %83 = vector.load %arg12[%c0_60, %c0_61] : memref<1x128xf32, #tpu.memory_space<vmem>>, vector<1x128xf32>
      %84 = vector.broadcast %83 : vector<1x128xf32> to vector<16x128xf32>
      %85 = arith.mulf %82, %84 : vector<16x128xf32>
      %c0_62 = arith.constant 0 : index
      %c0_63 = arith.constant 0 : index
      %86 = vector.load %arg13[%c0_62, %c0_63] : memref<1x128xf32, #tpu.memory_space<vmem>>, vector<1x128xf32>
      %87 = vector.broadcast %86 : vector<1x128xf32> to vector<16x128xf32>
      %88 = arith.addf %85, %87 : vector<16x128xf32>
      %c0_64 = arith.constant 0 : index
      %c0_65 = arith.constant 0 : index
      %c0_66 = arith.constant 0 : index
      %89 = vector.load %arg14[%c0_64, %c0_65, %c0_66] : memref<1x16x128xf32, #tpu.memory_space<vmem>>, vector<1x16x128xf32>
      %90 = vector.shape_cast %89 : vector<1x16x128xf32> to vector<16x128xf32>
      %91 = vector.shape_cast %88 : vector<16x128xf32> to vector<1x16x128xf32>
      tpu.vector_store %arg14[%c0_64, %c0_65, %c0_66], %91 {strides = array<i32>} : memref<1x16x128xf32, #tpu.memory_space<vmem>>, vector<1x16x128xf32>,
    } else {
    }
    return
  }
  func.func @transform_0(%arg0: i32, %arg1: i32) -> (i32, i32, i32) {
    %c0_i32 = arith.constant 0 : i32
    %c0_i32_0 = arith.constant 0 : i32
    %c0_i32_1 = arith.constant 0 : i32
    %c0_i32_2 = arith.constant 0 : i32
    return %c0_i32, %c0_i32_0, %c0_i32_1 : i32, i32, i32
  }
  func.func @transform_1(%arg0: i32, %arg1: i32) -> (i32, i32) {
    %c0_i32 = arith.constant 0 : i32
    %c0_i32_0 = arith.constant 0 : i32
    %c0_i32_1 = arith.constant 0 : i32
    return %c0_i32, %c0_i32_0 : i32, i32
  }
  func.func @transform_2(%arg0: i32, %arg1: i32) -> (i32, i32, i32) {
    %c0_i32 = arith.constant 0 : i32
    %c0_i32_0 = arith.constant 0 : i32
    return %arg0, %c0_i32, %arg1 : i32, i32, i32
  }
  func.func @transform_3(%arg0: i32, %arg1: i32) -> (i32, i32) {
    %c0_i32 = arith.constant 0 : i32
    %c0_i32_0 = arith.constant 0 : i32
    return %c0_i32, %arg1 : i32, i32
  }
  func.func @transform_4(%arg0: i32, %arg1: i32) -> (i32, i32) {
    %c0_i32 = arith.constant 0 : i32
    %c0_i32_0 = arith.constant 0 : i32
    %c0_i32_1 = arith.constant 0 : i32
    return %c0_i32, %c0_i32_0 : i32, i32
  }
  func.func @transform_5(%arg0: i32, %arg1: i32) -> (i32, i32) {
    %c0_i32 = arith.constant 0 : i32
    %c0_i32_0 = arith.constant 0 : i32
    %c0_i32_1 = arith.constant 0 : i32
    return %c0_i32, %c0_i32_0 : i32, i32
  }
  func.func @transform_6(%arg0: i32, %arg1: i32) -> (i32, i32) {
    %c0_i32 = arith.constant 0 : i32
    %c0_i32_0 = arith.constant 0 : i32
    %c0_i32_1 = arith.constant 0 : i32
    return %c0_i32, %c0_i32_0 : i32, i32
  }
  func.func @transform_7(%arg0: i32, %arg1: i32) -> (i32, i32) {
    %c0_i32 = arith.constant 0 : i32
    %c0_i32_0 = arith.constant 0 : i32
    %c0_i32_1 = arith.constant 0 : i32
    return %c0_i32, %c0_i32_0 : i32, i32
  }
  func.func @transform_8(%arg0: i32, %arg1: i32) -> (i32, i32, i32) {
    %c0_i32 = arith.constant 0 : i32
    %c0_i32_0 = arith.constant 0 : i32
    %c0_i32_1 = arith.constant 0 : i32
    %c0_i32_2 = arith.constant 0 : i32
    return %c0_i32, %c0_i32_0, %c0_i32_1 : i32, i32, i32
  }
  func.func @transform_9(%arg0: i32, %arg1: i32) -> (i32, i32) {
    %c0_i32 = arith.constant 0 : i32
    %c0_i32_0 = arith.constant 0 : i32
    %c0_i32_1 = arith.constant 0 : i32
    return %c0_i32, %c0_i32_0 : i32, i32
  }
  func.func @transform_10(%arg0: i32, %arg1: i32) -> (i32, i32) {
    %c0_i32 = arith.constant 0 : i32
    %c0_i32_0 = arith.constant 0 : i32
    %c0_i32_1 = arith.constant 0 : i32
    return %c0_i32, %c0_i32_0 : i32, i32
  }
  func.func @transform_11(%arg0: i32, %arg1: i32) -> (i32, i32) {
    %c0_i32 = arith.constant 0 : i32
    %c0_i32_0 = arith.constant 0 : i32
    %c0_i32_1 = arith.constant 0 : i32
    return %c0_i32, %c0_i32_0 : i32, i32
  }
  func.func @transform_12(%arg0: i32, %arg1: i32) -> (i32, i32, i32) {
    %c0_i32 = arith.constant 0 : i32
    %c0_i32_0 = arith.constant 0 : i32
    %c0_i32_1 = arith.constant 0 : i32
    return %arg0, %c0_i32, %c0_i32_0 : i32, i32, i32
  }
}

</mosaic_0001>

<llo_original>
// kernel: tpu_custom_call.1
$region0: #{tpu_custom_call.1}
  #allocation0 [shape = 'u32[]', space=smem, size = 0x4, offset = 0x4, fixed_abs, tag = 'smem constant byte address 0x4 - core index']
  #allocation1 [shape = 'u32[72,128]{1,0:T(1,128)}', space=vmem, size = 0x9000, scoped, tag = 'internal scratch']
  #allocation2 [shape = 'f32[4,16,1]{2,1,0:T(8,128)}', space=vmem, size = 0x8000, scoped, tag = 'scratch operand']
  #allocation3 [shape = 'f32[4,16,1]{2,1,0:T(8,128)}', space=vmem, size = 0x8000, scoped, tag = 'scratch operand']
  #allocation4 [shape = 'f32[4,16,32]{2,1,0:T(8,128)}', space=vmem, size = 0x8000, scoped, tag = 'scratch operand']
  %s0 = inlined_call_operand.hbm [shape: bf16[4,16,32], index: 0, kind: input, shape index: {}]
  %s1 = inlined_call_operand.hbm [shape: f32[16,128], index: 1, kind: input, shape index: {}]
  %s2 = inlined_call_operand.vmem [shape: bf16[2,128,256], index: 2, kind: input, shape index: {}]
  %s3 = inlined_call_operand.hbm [shape: bf16[128,256], index: 3, kind: input, shape index: {}]
  %s4 = inlined_call_operand.hbm [shape: bf16[128,128], index: 4, kind: input, shape index: {}]
  %s5 = inlined_call_operand.vmem [shape: f32[128,1], index: 5, kind: input, shape index: {}]
  %s6 = inlined_call_operand.hbm [shape: bf16[128,128], index: 6, kind: input, shape index: {}]
  %s7 = inlined_call_operand.vmem [shape: f32[128,1], index: 7, kind: input, shape index: {}]
  %s8 = inlined_call_operand.hbm [shape: bf16[4,32,128], index: 8, kind: input, shape index: {}]
  %s9 = inlined_call_operand.vmem [shape: f32[1,128], index: 9, kind: input, shape index: {}]
  %s10 = inlined_call_operand.vmem [shape: f32[1,128], index: 10, kind: input, shape index: {}]
  %s11 = inlined_call_operand.vmem [shape: f32[1,128], index: 11, kind: input, shape index: {}]
  %s12 = inlined_call_operand.hbm [shape: f32[2,16,128], index: 12, kind: output, shape index: {}]
  %s13 = sld [smem:[#allocation0]]
  $region154: #{tpu_custom_call.1} parent=0
    _
  %s15 = ssub.s32 1, %s13
  %s16 = scalar_select 0, %s15, %s13
  $region1: #{tpu_custom_call.1} parent=0
    #allocation5 [shape = 'u8[16384]{0}', space=vmem, size = 0x4000, scoped, tag = 'input window, operand 0, single buffered']
    #allocation6 [shape = 's32[2]{0}', space=sflag, size = 0x8, scoped, tag = 'scoped memory for tpu_custom_call.1']
    #allocation7 [shape = 's32[2]{0}', space=sflag, size = 0x8, scoped, tag = 'scoped memory for tpu_custom_call.1']
    #allocation8 [shape = 'u8[8192]{0}', space=vmem, size = 0x2000, scoped, tag = 'input window, operand 1, single buffered']
    #allocation9 [shape = 's32[1]{0}', space=sflag, size = 0x4, scoped, tag = 'scoped memory for tpu_custom_call.1']
    #allocation10 [shape = 'u8[65536]{0}', space=vmem, size = 0x10000, scoped, tag = 'input window, operand 2']
    #allocation11 [shape = 'u8[65536]{0}', space=vmem, size = 0x10000, scoped, tag = 'input window, operand 3']
    #allocation12 [shape = 'u8[32768]{0}', space=vmem, size = 0x8000, scoped, tag = 'input window, operand 4, single buffered']
    #allocation13 [shape = 'u8[32768]{0}', space=vmem, size = 0x8000, scoped, tag = 'input window, operand 6, single buffered']
    #allocation14 [shape = 's32[1]{0}', space=sflag, size = 0x4, scoped, tag = 'scoped memory for tpu_custom_call.1']
    #allocation15 [shape = 'u8[32768]{0}', space=vmem, size = 0x8000, scoped, tag = 'input window, operand 8, single buffered']
    #allocation16 [shape = 'u8[16384]{0}', space=vmem, size = 0x4000, scoped, tag = 'output window, operand 0']
    %17 = vsyncpa [#allocation6], 0
    %18 = vsyncpa [#allocation9], 0
    %19 = vsyncpa [#allocation14], 0
    %20 = vsyncpa [#allocation7], 0
    %s21 = scalar_lea.sflag [#allocation7], 1
    %22 = vsyncpa %s21, 0
    loop: start=0, step=1, limit=6
    $region2: #{tpu_custom_call.1} parent=1 // loop_pre_header
      _
    $region3: #{tpu_custom_call.1} parent=1 // loop_header
      %s24 = sphi 0, %s28
      %p25 = scmp.ge.s32.totalorder %s24, 6
      %s31 = sphi 0, %s43
      %s32 = sphi 0, %s39
      %s33 = sphi 0, %s31
      %s34 = sphi 0, %s32
      %s35 = sphi 0, %s33
      %s36 = sphi 0, %s34
      %s44 = sphi 0, %s44
      %s46 = sphi 0, %s44
      %s47 = sphi 0, %s46
      %s61 = sphi 0, %s47
      %s65 = sphi 0, %s65
      %s67 = sphi 0, %s65
      %s68 = sphi 0, %s67
      %s82 = sphi 0, %s68
      %s90 = sphi 0, %s92
      %s93 = sphi 0, %s90
      %s94 = sphi 0, %s93
      %s110 = sphi 0, %s94
      %s116 = sphi 0, %s118
      %s119 = sphi 0, %s116
      %s120 = sphi 0, %s119
      %s136 = sphi 0, %s120
      %s140 = sphi 0, %s140
      %s142 = sphi 0, %s140
      %s143 = sphi 0, %s142
      %s157 = sphi 0, %s143
      %s161 = sphi 0, %s161
      %s163 = sphi 0, %s161
      %s164 = sphi 0, %s163
      %s178 = sphi 0, %s164
      %s182 = sphi 0, %s182
      %s184 = sphi 0, %s182
      %s185 = sphi 0, %s184
      %s199 = sphi 0, %s185
      %s203 = sphi 0, %s203
      %s205 = sphi 0, %s203
      %s206 = sphi 0, %s205
      %s220 = sphi 0, %s206
      %s224 = sphi 0, %s224
      %s226 = sphi 0, %s224
      %s227 = sphi 0, %s226
      %s241 = sphi 0, %s227
      %s245 = sphi 0, %s245
      %s247 = sphi 0, %s245
      %s248 = sphi 0, %s247
      %s262 = sphi 0, %s248
      %s266 = sphi 0, %s266
      %s268 = sphi 0, %s266
      %s269 = sphi 0, %s268
      %s283 = sphi 0, %s269
      %s287 = sphi 0, %s287
      %s289 = sphi 0, %s287
      %s290 = sphi 0, %s289
      %s304 = sphi 0, %s290
      %s310 = sphi 0, %s312
      %s313 = sphi 0, %s310
      %s314 = sphi 0, %s313
      %s330 = sphi 0, %s314
    $region4: #{tpu_custom_call.1} parent=1 // loop_header_branch
      %27 = sbr.rel (%p25) target = $region8
    $region5: #{tpu_custom_call.1} parent=1 // loop_body
      %s29 = ssub.s32 %s24, 1
      %s30 = ssub.s32 %s24, 2
      %s37 = sadd.s32 1, %s32
      %p38 = scmp.ge.s32.totalorder %s37, 2
      %s39 = scalar_select %p38, 0, %s37
      %s40 = sadd.s32 1, %s31
      %s41 = scalar_select %p38, %s40, %s31
      %p42 = scmp.ge.s32.totalorder %s41, 2
      %s43 = scalar_select %p42, 0, %s41
      %s45 = sadd.s32 %s44, 1
      %p48 = scmp.eq.s32.totalorder %s24, 3
      %p49 = scmp.ne.s32.totalorder %s44, %s46
      %p50 = scmp.eq.s32.totalorder %s24, 0
      %p51 = por %p49, %p50
      %p52 = scmp.ne.s32.totalorder %s44, %s46
      %p53 = scmp.eq.s32.totalorder %s29, 3
      %p54 = por %p52, %p53
      %p55 = scmp.ne.s32.totalorder %s46, %s47
      %p56 = scmp.eq.s32.totalorder %s29, 0
      %p57 = por %p55, %p56
      %p58 = scmp.ne.s32.totalorder %s46, %s47
      %p59 = scmp.eq.s32.totalorder %s30, 3
      %p60 = por %p58, %p59
      %p62 = scmp.ne.s32.totalorder %s47, %s61
      %p63 = scmp.eq.s32.totalorder %s30, 0
      %p64 = por %p62, %p63
      %s66 = sadd.s32 %s65, 1
      %p69 = scmp.eq.s32.totalorder %s24, 3
      %p70 = scmp.ne.s32.totalorder %s65, %s67
      %p71 = scmp.eq.s32.totalorder %s24, 0
      %p72 = por %p70, %p71
      %p73 = scmp.ne.s32.totalorder %s65, %s67
      %p74 = scmp.eq.s32.totalorder %s29, 3
      %p75 = por %p73, %p74
      %p76 = scmp.ne.s32.totalorder %s67, %s68
      %p77 = scmp.eq.s32.totalorder %s29, 0
      %p78 = por %p76, %p77
      %p79 = scmp.ne.s32.totalorder %s67, %s68
      %p80 = scmp.eq.s32.totalorder %s30, 3
      %p81 = por %p79, %p80
      %p83 = scmp.ne.s32.totalorder %s68, %s82
      %p84 = scmp.eq.s32.totalorder %s30, 0
      %p85 = por %p83, %p84
      %s86 = ssub.s32 %s31, %s43
      %s87 = ssub.s32 %s32, %s39
      %s88 = sor.u32 %s86, %s87
      %p89 = scmp.eq.s32.totalorder %s88, 0
      %s91 = sadd.s32 %s90, 1
      %s92 = scalar_select %p89, %s90, %s91
      %p95 = pneg %p89
      %p96 = scmp.eq.s32.totalorder %s24, 3
      %p97 = por %p95, %p96
      %p98 = scmp.ne.s32.totalorder %s90, %s93
      %p99 = scmp.eq.s32.totalorder %s24, 0
      %p100 = por %p98, %p99
      %p101 = scmp.ne.s32.totalorder %s90, %s93
      %p102 = scmp.eq.s32.totalorder %s29, 3
      %p103 = por %p101, %p102
      %p104 = scmp.ne.s32.totalorder %s93, %s94
      %p105 = scmp.eq.s32.totalorder %s29, 0
      %p106 = por %p104, %p105
      %p107 = scmp.ne.s32.totalorder %s93, %s94
      %p108 = scmp.eq.s32.totalorder %s30, 3
      %p109 = por %p107, %p108
      %p111 = scmp.ne.s32.totalorder %s94, %s110
      %p112 = scmp.eq.s32.totalorder %s30, 0
      %p113 = por %p111, %p112
      %s114 = ssub.s32 %s32, %s39
      %p115 = scmp.eq.s32.totalorder %s114, 0
      %s117 = sadd.s32 %s116, 1
      %s118 = scalar_select %p115, %s116, %s117
      %p121 = pneg %p115
      %p122 = scmp.eq.s32.totalorder %s24, 3
      %p123 = por %p121, %p122
      %p124 = scmp.ne.s32.totalorder %s116, %s119
      %p125 = scmp.eq.s32.totalorder %s24, 0
      %p126 = por %p124, %p125
      %p127 = scmp.ne.s32.totalorder %s116, %s119
      %p128 = scmp.eq.s32.totalorder %s29, 3
      %p129 = por %p127, %p128
      %p130 = scmp.ne.s32.totalorder %s119, %s120
      %p131 = scmp.eq.s32.totalorder %s29, 0
      %p132 = por %p130, %p131
      %p133 = scmp.ne.s32.totalorder %s119, %s120
      %p134 = scmp.eq.s32.totalorder %s30, 3
      %p135 = por %p133, %p134
      %p137 = scmp.ne.s32.totalorder %s120, %s136
      %p138 = scmp.eq.s32.totalorder %s30, 0
      %p139 = por %p137, %p138
      %s141 = sadd.s32 %s140, 1
      %p144 = scmp.eq.s32.totalorder %s24, 3
      %p145 = scmp.ne.s32.totalorder %s140, %s142
      %p146 = scmp.eq.s32.totalorder %s24, 0
      %p147 = por %p145, %p146
      %p148 = scmp.ne.s32.totalorder %s140, %s142
      %p149 = scmp.eq.s32.totalorder %s29, 3
      %p150 = por %p148, %p149
      %p151 = scmp.ne.s32.totalorder %s142, %s143
      %p152 = scmp.eq.s32.totalorder %s29, 0
      %p153 = por %p151, %p152
      %p154 = scmp.ne.s32.totalorder %s142, %s143
      %p155 = scmp.eq.s32.totalorder %s30, 3
      %p156 = por %p154, %p155
      %p158 = scmp.ne.s32.totalorder %s143, %s157
      %p159 = scmp.eq.s32.totalorder %s30, 0
      %p160 = por %p158, %p159
      %s162 = sadd.s32 %s161, 1
      %p165 = scmp.eq.s32.totalorder %s24, 3
      %p166 = scmp.ne.s32.totalorder %s161, %s163
      %p167 = scmp.eq.s32.totalorder %s24, 0
      %p168 = por %p166, %p167
      %p169 = scmp.ne.s32.totalorder %s161, %s163
      %p170 = scmp.eq.s32.totalorder %s29, 3
      %p171 = por %p169, %p170
      %p172 = scmp.ne.s32.totalorder %s163, %s164
      %p173 = scmp.eq.s32.totalorder %s29, 0
      %p174 = por %p172, %p173
      %p175 = scmp.ne.s32.totalorder %s163, %s164
      %p176 = scmp.eq.s32.totalorder %s30, 3
      %p177 = por %p175, %p176
      %p179 = scmp.ne.s32.totalorder %s164, %s178
      %p180 = scmp.eq.s32.totalorder %s30, 0
      %p181 = por %p179, %p180
      %s183 = sadd.s32 %s182, 1
      %p186 = scmp.eq.s32.totalorder %s24, 3
      %p187 = scmp.ne.s32.totalorder %s182, %s184
      %p188 = scmp.eq.s32.totalorder %s24, 0
      %p189 = por %p187, %p188
      %p190 = scmp.ne.s32.totalorder %s182, %s184
      %p191 = scmp.eq.s32.totalorder %s29, 3
      %p192 = por %p190, %p191
      %p193 = scmp.ne.s32.totalorder %s184, %s185
      %p194 = scmp.eq.s32.totalorder %s29, 0
      %p195 = por %p193, %p194
      %p196 = scmp.ne.s32.totalorder %s184, %s185
      %p197 = scmp.eq.s32.totalorder %s30, 3
      %p198 = por %p196, %p197
      %p200 = scmp.ne.s32.totalorder %s185, %s199
      %p201 = scmp.eq.s32.totalorder %s30, 0
      %p202 = por %p200, %p201
      %s204 = sadd.s32 %s203, 1
      %p207 = scmp.eq.s32.totalorder %s24, 3
      %p208 = scmp.ne.s32.totalorder %s203, %s205
      %p209 = scmp.eq.s32.totalorder %s24, 0
      %p210 = por %p208, %p209
      %p211 = scmp.ne.s32.totalorder %s203, %s205
      %p212 = scmp.eq.s32.totalorder %s29, 3
      %p213 = por %p211, %p212
      %p214 = scmp.ne.s32.totalorder %s205, %s206
      %p215 = scmp.eq.s32.totalorder %s29, 0
      %p216 = por %p214, %p215
      %p217 = scmp.ne.s32.totalorder %s205, %s206
      %p218 = scmp.eq.s32.totalorder %s30, 3
      %p219 = por %p217, %p218
      %p221 = scmp.ne.s32.totalorder %s206, %s220
      %p222 = scmp.eq.s32.totalorder %s30, 0
      %p223 = por %p221, %p222
      %s225 = sadd.s32 %s224, 1
      %p228 = scmp.eq.s32.totalorder %s24, 3
      %p229 = scmp.ne.s32.totalorder %s224, %s226
      %p230 = scmp.eq.s32.totalorder %s24, 0
      %p231 = por %p229, %p230
      %p232 = scmp.ne.s32.totalorder %s224, %s226
      %p233 = scmp.eq.s32.totalorder %s29, 3
      %p234 = por %p232, %p233
      %p235 = scmp.ne.s32.totalorder %s226, %s227
      %p236 = scmp.eq.s32.totalorder %s29, 0
      %p237 = por %p235, %p236
      %p238 = scmp.ne.s32.totalorder %s226, %s227
      %p239 = scmp.eq.s32.totalorder %s30, 3
      %p240 = por %p238, %p239
      %p242 = scmp.ne.s32.totalorder %s227, %s241
      %p243 = scmp.eq.s32.totalorder %s30, 0
      %p244 = por %p242, %p243
      %s246 = sadd.s32 %s245, 1
      %p249 = scmp.eq.s32.totalorder %s24, 3
      %p250 = scmp.ne.s32.totalorder %s245, %s247
      %p251 = scmp.eq.s32.totalorder %s24, 0
      %p252 = por %p250, %p251
      %p253 = scmp.ne.s32.totalorder %s245, %s247
      %p254 = scmp.eq.s32.totalorder %s29, 3
      %p255 = por %p253, %p254
      %p256 = scmp.ne.s32.totalorder %s247, %s248
      %p257 = scmp.eq.s32.totalorder %s29, 0
      %p258 = por %p256, %p257
      %p259 = scmp.ne.s32.totalorder %s247, %s248
      %p260 = scmp.eq.s32.totalorder %s30, 3
      %p261 = por %p259, %p260
      %p263 = scmp.ne.s32.totalorder %s248, %s262
      %p264 = scmp.eq.s32.totalorder %s30, 0
      %p265 = por %p263, %p264
      %s267 = sadd.s32 %s266, 1
      %p270 = scmp.eq.s32.totalorder %s24, 3
      %p271 = scmp.ne.s32.totalorder %s266, %s268
      %p272 = scmp.eq.s32.totalorder %s24, 0
      %p273 = por %p271, %p272
      %p274 = scmp.ne.s32.totalorder %s266, %s268
      %p275 = scmp.eq.s32.totalorder %s29, 3
      %p276 = por %p274, %p275
      %p277 = scmp.ne.s32.totalorder %s268, %s269
      %p278 = scmp.eq.s32.totalorder %s29, 0
      %p279 = por %p277, %p278
      %p280 = scmp.ne.s32.totalorder %s268, %s269
      %p281 = scmp.eq.s32.totalorder %s30, 3
      %p282 = por %p280, %p281
      %p284 = scmp.ne.s32.totalorder %s269, %s283
      %p285 = scmp.eq.s32.totalorder %s30, 0
      %p286 = por %p284, %p285
      %s288 = sadd.s32 %s287, 1
      %p291 = scmp.eq.s32.totalorder %s24, 3
      %p292 = scmp.ne.s32.totalorder %s287, %s289
      %p293 = scmp.eq.s32.totalorder %s24, 0
      %p294 = por %p292, %p293
      %p295 = scmp.ne.s32.totalorder %s287, %s289
      %p296 = scmp.eq.s32.totalorder %s29, 3
      %p297 = por %p295, %p296
      %p298 = scmp.ne.s32.totalorder %s289, %s290
      %p299 = scmp.eq.s32.totalorder %s29, 0
      %p300 = por %p298, %p299
      %p301 = scmp.ne.s32.totalorder %s289, %s290
      %p302 = scmp.eq.s32.totalorder %s30, 3
      %p303 = por %p301, %p302
      %p305 = scmp.ne.s32.totalorder %s290, %s304
      %p306 = scmp.eq.s32.totalorder %s30, 0
      %p307 = por %p305, %p306
      %s308 = ssub.s32 %s31, %s43
      %p309 = scmp.eq.s32.totalorder %s308, 0
      %s311 = sadd.s32 %s310, 1
      %s312 = scalar_select %p309, %s310, %s311
      %p315 = pneg %p309
      %p316 = scmp.eq.s32.totalorder %s24, 3
      %p317 = por %p315, %p316
      %p318 = scmp.ne.s32.totalorder %s310, %s313
      %p319 = scmp.eq.s32.totalorder %s24, 0
      %p320 = por %p318, %p319
      %p321 = scmp.ne.s32.totalorder %s310, %s313
      %p322 = scmp.eq.s32.totalorder %s29, 3
      %p323 = por %p321, %p322
      %p324 = scmp.ne.s32.totalorder %s313, %s314
      %p325 = scmp.eq.s32.totalorder %s29, 0
      %p326 = por %p324, %p325
      %p327 = scmp.ne.s32.totalorder %s313, %s314
      %p328 = scmp.eq.s32.totalorder %s30, 3
      %p329 = por %p327, %p328
      %p331 = scmp.ne.s32.totalorder %s314, %s330
      %p332 = scmp.eq.s32.totalorder %s30, 0
      %p333 = por %p331, %p332
      %p334 = scmp.le.s32.totalorder 1, %s24
      %p335 = scmp.lt.s32.totalorder %s24, 5
      %p336 = pnand %p334, %p335
      %p337 = pneg %p336
      // Predicated region
      $region9: #{tpu_custom_call.1} parent=5 // pred_check
        _
      $region10: #{tpu_custom_call.1} parent=5 // pred_check_branch
        %339 = sbr.rel (%p336) target = $region12
      $region11: #{tpu_custom_call.1} parent=5 // pred_region
        %s340 = ssub.s32 %s24, 1
        // Predicated region
        $region13: #{tpu_custom_call.1} parent=11 // pred_check
          %p341 = pneg %p57
        $region14: #{tpu_custom_call.1} parent=11 // pred_check_branch
          %343 = sbr.rel (%p341) target = $region16
        $region15: #{tpu_custom_call.1} parent=11 // pred_region
          %345 = vsyncadd [#allocation6], 0
          %s346 = sshll.u32 %s0, 4
          %s347 = int_to_ptr.hbm [resolvable:$true] %s346
          %s348 = sshll.u32 [#allocation5], 4
          %s349 = int_to_ptr.vmem [resolvable:$true] %s348
          %354 = dma.hbm_to_vmem [thread:$0]  %s347, 512, %s349, [#allocation6], 64, 64, 4
        $region16: #{tpu_custom_call.1} parent=11 // pred_fallthru
          _
        // Predicated region
        $region17: #{tpu_custom_call.1} parent=11 // pred_check
          %p355 = pneg %p78
        $region18: #{tpu_custom_call.1} parent=11 // pred_check_branch
          %357 = sbr.rel (%p355) target = $region20
        $region19: #{tpu_custom_call.1} parent=11 // pred_region
          %359 = vsyncadd [#allocation9], 0
          %s360 = sshll.u32 %s1, 4
          %s361 = int_to_ptr.hbm [resolvable:$true] %s360
          %s362 = sshll.u32 [#allocation8], 4
          %s363 = int_to_ptr.vmem [resolvable:$true] %s362
          %368 = dma.hbm_to_vmem [thread:$0]  %s361, 256, %s363, [#allocation9], 128, 128, 8
        $region20: #{tpu_custom_call.1} parent=11 // pred_fallthru
          _
        // Predicated region
        $region21: #{tpu_custom_call.1} parent=11 // pred_check
          %p369 = pneg %p153
        $region22: #{tpu_custom_call.1} parent=11 // pred_check_branch
          %371 = sbr.rel (%p369) target = $region24
        $region23: #{tpu_custom_call.1} parent=11 // pred_region
          %373 = vsyncadd [#allocation9], 0
          %s374 = sshll.u32 %s4, 4
          %s375 = int_to_ptr.hbm [resolvable:$true] %s374
          %s376 = sshll.u32 [#allocation12], 4
          %s377 = int_to_ptr.vmem [resolvable:$true] %s376
          %382 = dma.hbm_to_vmem [thread:$0]  %s375, 1024, %s377, [#allocation9], 64, 64, 4
        $region24: #{tpu_custom_call.1} parent=11 // pred_fallthru
          _
        // Predicated region
        $region25: #{tpu_custom_call.1} parent=11 // pred_check
          %p383 = pneg %p174
        $region26: #{tpu_custom_call.1} parent=11 // pred_check_branch
          %385 = sbr.rel (%p383) target = $region28
        $region27: #{tpu_custom_call.1} parent=11 // pred_region
          _
        $region28: #{tpu_custom_call.1} parent=11 // pred_fallthru
          _
        // Predicated region
        $region29: #{tpu_custom_call.1} parent=11 // pred_check
          %p386 = pneg %p195
        $region30: #{tpu_custom_call.1} parent=11 // pred_check_branch
          %388 = sbr.rel (%p386) target = $region32
        $region31: #{tpu_custom_call.1} parent=11 // pred_region
          %390 = vsyncadd [#allocation14], 0
          %s391 = sshll.u32 %s6, 4
          %s392 = int_to_ptr.hbm [resolvable:$true] %s391
          %s393 = sshll.u32 [#allocation13], 4
          %s394 = int_to_ptr.vmem [resolvable:$true] %s393
          %399 = dma.hbm_to_vmem [thread:$0]  %s392, 1024, %s394, [#allocation14], 64, 64, 4
        $region32: #{tpu_custom_call.1} parent=11 // pred_fallthru
          _
        // Predicated region
        $region33: #{tpu_custom_call.1} parent=11 // pred_check
          %p400 = pneg %p216
        $region34: #{tpu_custom_call.1} parent=11 // pred_check_branch
          %402 = sbr.rel (%p400) target = $region36
        $region35: #{tpu_custom_call.1} parent=11 // pred_region
          _
        $region36: #{tpu_custom_call.1} parent=11 // pred_fallthru
          _
        // Predicated region
        $region37: #{tpu_custom_call.1} parent=11 // pred_check
          %p403 = pneg %p237
        $region38: #{tpu_custom_call.1} parent=11 // pred_check_branch
          %405 = sbr.rel (%p403) target = $region40
        $region39: #{tpu_custom_call.1} parent=11 // pred_region
          %407 = vsyncadd [#allocation14], 0
          %s408 = sshll.u32 %s8, 4
          %s409 = int_to_ptr.hbm [resolvable:$true] %s408
          %s410 = sshll.u32 [#allocation15], 4
          %s411 = int_to_ptr.vmem [resolvable:$true] %s410
          %416 = dma.hbm_to_vmem [thread:$0]  %s409, 1024, %s411, [#allocation14], 64, 64, 4
        $region40: #{tpu_custom_call.1} parent=11 // pred_fallthru
          _
        // Predicated region
        $region41: #{tpu_custom_call.1} parent=11 // pred_check
          %p417 = pneg %p258
        $region42: #{tpu_custom_call.1} parent=11 // pred_check_branch
          %419 = sbr.rel (%p417) target = $region44
        $region43: #{tpu_custom_call.1} parent=11 // pred_region
          _
        $region44: #{tpu_custom_call.1} parent=11 // pred_fallthru
          _
        // Predicated region
        $region45: #{tpu_custom_call.1} parent=11 // pred_check
          %p420 = pneg %p279
        $region46: #{tpu_custom_call.1} parent=11 // pred_check_branch
          %422 = sbr.rel (%p420) target = $region48
        $region47: #{tpu_custom_call.1} parent=11 // pred_region
          _
        $region48: #{tpu_custom_call.1} parent=11 // pred_fallthru
          _
        // Predicated region
        $region49: #{tpu_custom_call.1} parent=11 // pred_check
          %p423 = pneg %p300
        $region50: #{tpu_custom_call.1} parent=11 // pred_check_branch
          %425 = sbr.rel (%p423) target = $region52
        $region51: #{tpu_custom_call.1} parent=11 // pred_region
          _
        $region52: #{tpu_custom_call.1} parent=11 // pred_fallthru
          _
      $region12: #{tpu_custom_call.1} parent=5 // pred_fallthru
        _
      %p426 = scmp.lt.s32.totalorder %s24, 4
      // Predicated region
      $region53: #{tpu_custom_call.1} parent=5 // pred_check
        %p427 = pneg %p426
      $region54: #{tpu_custom_call.1} parent=5 // pred_check_branch
        %429 = sbr.rel (%p427) target = $region56
      $region55: #{tpu_custom_call.1} parent=5 // pred_region
        // Predicated region
        $region57: #{tpu_custom_call.1} parent=55 // pred_check
          %p430 = pneg %p100
        $region58: #{tpu_custom_call.1} parent=55 // pred_check_branch
          %432 = sbr.rel (%p430) target = $region60
        $region59: #{tpu_custom_call.1} parent=55 // pred_region
          %s433 = sand.u32 %s90, 1
          %s434 = sand.u32 %s90, 1
          %s435 = smul.addr %s434, 64
          %s436 = scalar_lea.vmem [#allocation10], %s435
          %s437 = smul.addr %s31, 32
          %s438 = sadd.s32 %s32, %s437
          %s439 = smul.addr %s438, 4
          %s440 = scalar_lea.vmem %s2, %s439
          // Predicated region
          $region61: #{tpu_custom_call.1} parent=59 // pred_check
            _
          $region62: #{tpu_custom_call.1} parent=59 // pred_check_branch
            %442 = sbr.rel (0) target = $region64
          $region63: #{tpu_custom_call.1} parent=59 // pred_region
            // Predicated region
            $region65: #{tpu_custom_call.1} parent=63 // pred_check
              _
            $region66: #{tpu_custom_call.1} parent=63 // pred_check_branch
              %444 = sbr.rel target = $region68
            $region67: #{tpu_custom_call.1} parent=63 // pred_region
              // Predicated region
              $region80: #{tpu_custom_call.1} parent=67 // pred_check
                _
              $region81: #{tpu_custom_call.1} parent=67 // pred_check_branch
                %490 = sbr.rel (0) target = $region83
              $region82: #{tpu_custom_call.1} parent=67 // pred_region
                loop: start=0, step=1, limit=1
                $region84: #{tpu_custom_call.1} parent=82 // loop_pre_header
                  _
                $region85: #{tpu_custom_call.1} parent=82 // loop_header
                  %s492 = sphi 0, %s496
                  %p493 = scmp.ge.s32.totalorder %s492, 1
                  %s497 = sphi %s440, %s440
                  %s498 = sphi %s436, %s436
                $region86: #{tpu_custom_call.1} parent=82 // loop_header_branch
                  %495 = sbr.rel (%p493) target = $region90
                $region87: #{tpu_custom_call.1} parent=82 // loop_body
                  _
                $region88: #{tpu_custom_call.1} parent=82 // loop_footer
                  %s496 = sadd.s32 1, %s492
                $region89: #{tpu_custom_call.1} parent=82 // loop_footer_branch
                  %491 = sbr.rel target = $region85
                $region90: #{tpu_custom_call.1} parent=82 // loop_exit
                  _
                %s500 = ssub.s32 16, 1
                loop: start=0, step=1, limit=1
                $region91: #{tpu_custom_call.1} parent=82 // loop_pre_header
                  _
                $region92: #{tpu_custom_call.1} parent=82 // loop_header
                  %s502 = sphi 0, %s506
                  %p503 = scmp.ge.s32.totalorder %s502, 1
                  %s507 = sphi %s440, %s440
                  %s508 = sphi %s436, %s436
                $region93: #{tpu_custom_call.1} parent=82 // loop_header_branch
                  %505 = sbr.rel (%p503) target = $region97
                $region94: #{tpu_custom_call.1} parent=82 // loop_body
                  %v509 = vld [vmem:[%s507] sm:%s500]
                  %510 = vst [vmem:[%s508] sm:%s500] %v509
                  %v511 = vld [vmem:[%s507 + $0x8] sm:%s500]
                  %512 = vst [vmem:[%s508 + $0x4] sm:%s500] %v511
                  %v513 = vld [vmem:[%s507 + $0x10] sm:%s500]
                  %514 = vst [vmem:[%s508 + $0x8] sm:%s500] %v513
                  %v515 = vld [vmem:[%s507 + $0x18] sm:%s500]
                  %516 = vst [vmem:[%s508 + $0xc] sm:%s500] %v515
                  %v517 = vld [vmem:[%s507 + $0x20] sm:%s500]
                  %518 = vst [vmem:[%s508 + $0x10] sm:%s500] %v517
                  %v519 = vld [vmem:[%s507 + $0x28] sm:%s500]
                  %520 = vst [vmem:[%s508 + $0x14] sm:%s500] %v519
                  %v521 = vld [vmem:[%s507 + $0x30] sm:%s500]
                  %522 = vst [vmem:[%s508 + $0x18] sm:%s500] %v521
                  %v523 = vld [vmem:[%s507 + $0x38] sm:%s500]
                  %524 = vst [vmem:[%s508 + $0x1c] sm:%s500] %v523
                  %v525 = vld [vmem:[%s507 + $0x40] sm:%s500]
                  %526 = vst [vmem:[%s508 + $0x20] sm:%s500] %v525
                  %v527 = vld [vmem:[%s507 + $0x48] sm:%s500]
                  %528 = vst [vmem:[%s508 + $0x24] sm:%s500] %v527
                  %v529 = vld [vmem:[%s507 + $0x50] sm:%s500]
                  %530 = vst [vmem:[%s508 + $0x28] sm:%s500] %v529
                  %v531 = vld [vmem:[%s507 + $0x58] sm:%s500]
                  %532 = vst [vmem:[%s508 + $0x2c] sm:%s500] %v531
                  %v533 = vld [vmem:[%s507 + $0x60] sm:%s500]
                  %534 = vst [vmem:[%s508 + $0x30] sm:%s500] %v533
                  %v535 = vld [vmem:[%s507 + $0x68] sm:%s500]
                  %536 = vst [vmem:[%s508 + $0x34] sm:%s500] %v535
                  %v537 = vld [vmem:[%s507 + $0x70] sm:%s500]
                  %538 = vst [vmem:[%s508 + $0x38] sm:%s500] %v537
                  %v539 = vld [vmem:[%s507 + $0x78] sm:%s500]
                  %540 = vst [vmem:[%s508 + $0x3c] sm:%s500] %v539
                $region95: #{tpu_custom_call.1} parent=82 // loop_footer
                  %s506 = sadd.s32 1, %s502
                $region96: #{tpu_custom_call.1} parent=82 // loop_footer_branch
                  %501 = sbr.rel target = $region92
                $region97: #{tpu_custom_call.1} parent=82 // loop_exit
                  _
              $region83: #{tpu_custom_call.1} parent=67 // pred_fallthru
                _
            $region68: #{tpu_custom_call.1} parent=63 // pred_fallthru
              _
            // Predicated region
            $region69: #{tpu_custom_call.1} parent=63 // pred_check
              _
            $region70: #{tpu_custom_call.1} parent=63 // pred_check_branch
              %446 = sbr.rel (0) target = $region72
            $region71: #{tpu_custom_call.1} parent=63 // pred_region
              %s448 = ssub.s32 16, 1
              loop: start=0, step=1, limit=1
              $region73: #{tpu_custom_call.1} parent=71 // loop_pre_header
                _
              $region74: #{tpu_custom_call.1} parent=71 // loop_header
                %s450 = sphi 0, %s454
                %p451 = scmp.ge.s32.totalorder %s450, 1
                %s455 = sphi %s440, %s440
                %s456 = sphi %s436, %s436
              $region75: #{tpu_custom_call.1} parent=71 // loop_header_branch
                %453 = sbr.rel (%p451) target = $region79
              $region76: #{tpu_custom_call.1} parent=71 // loop_body
                %v457 = vld [vmem:[%s455] sm:%s448]
                %458 = vst [vmem:[%s456] sm:%s448] %v457
                %v459 = vld [vmem:[%s455 + $0x8] sm:%s448]
                %460 = vst [vmem:[%s456 + $0x4] sm:%s448] %v459
                %v461 = vld [vmem:[%s455 + $0x10] sm:%s448]
                %462 = vst [vmem:[%s456 + $0x8] sm:%s448] %v461
                %v463 = vld [vmem:[%s455 + $0x18] sm:%s448]
                %464 = vst [vmem:[%s456 + $0xc] sm:%s448] %v463
                %v465 = vld [vmem:[%s455 + $0x20] sm:%s448]
                %466 = vst [vmem:[%s456 + $0x10] sm:%s448] %v465
                %v467 = vld [vmem:[%s455 + $0x28] sm:%s448]
                %468 = vst [vmem:[%s456 + $0x14] sm:%s448] %v467
                %v469 = vld [vmem:[%s455 + $0x30] sm:%s448]
                %470 = vst [vmem:[%s456 + $0x18] sm:%s448] %v469
                %v471 = vld [vmem:[%s455 + $0x38] sm:%s448]
                %472 = vst [vmem:[%s456 + $0x1c] sm:%s448] %v471
                %v473 = vld [vmem:[%s455 + $0x40] sm:%s448]
                %474 = vst [vmem:[%s456 + $0x20] sm:%s448] %v473
                %v475 = vld [vmem:[%s455 + $0x48] sm:%s448]
                %476 = vst [vmem:[%s456 + $0x24] sm:%s448] %v475
                %v477 = vld [vmem:[%s455 + $0x50] sm:%s448]
                %478 = vst [vmem:[%s456 + $0x28] sm:%s448] %v477
                %v479 = vld [vmem:[%s455 + $0x58] sm:%s448]
                %480 = vst [vmem:[%s456 + $0x2c] sm:%s448] %v479
                %v481 = vld [vmem:[%s455 + $0x60] sm:%s448]
                %482 = vst [vmem:[%s456 + $0x30] sm:%s448] %v481
                %v483 = vld [vmem:[%s455 + $0x68] sm:%s448]
                %484 = vst [vmem:[%s456 + $0x34] sm:%s448] %v483
                %v485 = vld [vmem:[%s455 + $0x70] sm:%s448]
                %486 = vst [vmem:[%s456 + $0x38] sm:%s448] %v485
                %v487 = vld [vmem:[%s455 + $0x78] sm:%s448]
                %488 = vst [vmem:[%s456 + $0x3c] sm:%s448] %v487
              $region77: #{tpu_custom_call.1} parent=71 // loop_footer
                %s454 = sadd.s32 1, %s450
              $region78: #{tpu_custom_call.1} parent=71 // loop_footer_branch
                %449 = sbr.rel target = $region74
              $region79: #{tpu_custom_call.1} parent=71 // loop_exit
                _
            $region72: #{tpu_custom_call.1} parent=63 // pred_fallthru
              _
          $region64: #{tpu_custom_call.1} parent=59 // pred_fallthru
            _
          %541 = vnop
        $region60: #{tpu_custom_call.1} parent=55 // pred_fallthru
          _
        // Predicated region
        $region98: #{tpu_custom_call.1} parent=55 // pred_check
          %p542 = pneg %p126
        $region99: #{tpu_custom_call.1} parent=55 // pred_check_branch
          %544 = sbr.rel (%p542) target = $region101
        $region100: #{tpu_custom_call.1} parent=55 // pred_region
          %s545 = sand.u32 %s24, 1
          %s546 = scalar_lea.sflag [#allocation6], %s545
          %s547 = sand.u32 %s116, 1
          %s548 = smul.addr %s547, 64
          %s549 = scalar_lea.vmem [#allocation11], %s548
          %551 = vsyncadd %s546, 0
          %s552 = smul.addr %s32, 4
          %s553 = scalar_lea.hbm %s3, %s552
          %s554 = sshll.u32 %s553, 4
          %s555 = int_to_ptr.hbm [resolvable:$true] %s554
          %s556 = sshll.u32 %s549, 4
          %s557 = int_to_ptr.vmem [resolvable:$true] %s556
          %562 = dma.hbm_to_vmem [thread:$0]  %s555, 1024, %s557, %s546, 128, 64, 4
        $region101: #{tpu_custom_call.1} parent=55 // pred_fallthru
          _
      $region56: #{tpu_custom_call.1} parent=5 // pred_fallthru
        _
      %p563 = scmp.le.s32.totalorder 1, %s24
      %p564 = scmp.lt.s32.totalorder %s24, 5
      %p565 = pnand %p563, %p564
      %p566 = pneg %p565
      // Predicated region
      $region102: #{tpu_custom_call.1} parent=5 // pred_check
        _
      $region103: #{tpu_custom_call.1} parent=5 // pred_check_branch
        %568 = sbr.rel (%p565) target = $region105
      $region104: #{tpu_custom_call.1} parent=5 // pred_region
        %s569 = ssub.s32 %s24, 1
        // Predicated region
        $region106: #{tpu_custom_call.1} parent=104 // pred_check
          %p570 = pneg %p57
        $region107: #{tpu_custom_call.1} parent=104 // pred_check_branch
          %572 = sbr.rel (%p570) target = $region109
        $region108: #{tpu_custom_call.1} parent=104 // pred_region
          %574 = dma.done [#allocation6], 512
        $region109: #{tpu_custom_call.1} parent=104 // pred_fallthru
          _
        // Predicated region
        $region110: #{tpu_custom_call.1} parent=104 // pred_check
          %p575 = pneg %p78
        $region111: #{tpu_custom_call.1} parent=104 // pred_check_branch
          %577 = sbr.rel (%p575) target = $region113
        $region112: #{tpu_custom_call.1} parent=104 // pred_region
          %579 = dma.done [#allocation9], 256
        $region113: #{tpu_custom_call.1} parent=104 // pred_fallthru
          _
        %s580 = sand.u32 %s93, 1
        %s581 = sand.u32 %s93, 1
        %s582 = smul.addr %s581, 64
        %s583 = scalar_lea.vmem [#allocation10], %s582
        // Predicated region
        $region114: #{tpu_custom_call.1} parent=104 // pred_check
          %p584 = pneg %p106
        $region115: #{tpu_custom_call.1} parent=104 // pred_check_branch
          %586 = sbr.rel (%p584) target = $region117
        $region116: #{tpu_custom_call.1} parent=104 // pred_region
          _
        $region117: #{tpu_custom_call.1} parent=104 // pred_fallthru
          _
        %s587 = sand.u32 %s29, 1
        %s588 = scalar_lea.sflag [#allocation6], %s587
        %s589 = sand.u32 %s119, 1
        %s590 = smul.addr %s589, 64
        %s591 = scalar_lea.vmem [#allocation11], %s590
        // Predicated region
        $region118: #{tpu_custom_call.1} parent=104 // pred_check
          %p592 = pneg %p132
        $region119: #{tpu_custom_call.1} parent=104 // pred_check_branch
          %594 = sbr.rel (%p592) target = $region121
        $region120: #{tpu_custom_call.1} parent=104 // pred_region
          %596 = dma.done %s588, 1024
        $region121: #{tpu_custom_call.1} parent=104 // pred_fallthru
          _
        // Predicated region
        $region122: #{tpu_custom_call.1} parent=104 // pred_check
          %p597 = pneg %p153
        $region123: #{tpu_custom_call.1} parent=104 // pred_check_branch
          %599 = sbr.rel (%p597) target = $region125
        $region124: #{tpu_custom_call.1} parent=104 // pred_region
          %601 = dma.done [#allocation9], 1024
        $region125: #{tpu_custom_call.1} parent=104 // pred_fallthru
          _
        // Predicated region
        $region126: #{tpu_custom_call.1} parent=104 // pred_check
          %p602 = pneg %p195
        $region127: #{tpu_custom_call.1} parent=104 // pred_check_branch
          %604 = sbr.rel (%p602) target = $region129
        $region128: #{tpu_custom_call.1} parent=104 // pred_region
          %606 = dma.done [#allocation14], 1024
        $region129: #{tpu_custom_call.1} parent=104 // pred_fallthru
          _
        // Predicated region
        $region130: #{tpu_custom_call.1} parent=104 // pred_check
          %p607 = pneg %p237
        $region131: #{tpu_custom_call.1} parent=104 // pred_check_branch
          %609 = sbr.rel (%p607) target = $region133
        $region132: #{tpu_custom_call.1} parent=104 // pred_region
          %611 = dma.done [#allocation14], 1024
        $region133: #{tpu_custom_call.1} parent=104 // pred_fallthru
          _
        %p612 = pneg %p57
        %p613 = pneg %p54
        %p614 = pneg %p78
        %p615 = pneg %p75
        %s616 = sand.u32 %s93, 1
        %s617 = sand.u32 %s93, 1
        %s618 = smul.addr %s617, 64
        %s619 = scalar_lea.vmem [#allocation10], %s618
        %p620 = pneg %p106
        %p621 = pneg %p103
        %s622 = sand.u32 %s29, 1
        %s623 = scalar_lea.sflag [#allocation6], %s622
        %s624 = sand.u32 %s119, 1
        %s625 = smul.addr %s624, 64
        %s626 = scalar_lea.vmem [#allocation11], %s625
        %p627 = pneg %p132
        %p628 = pneg %p129
        %p629 = pneg %p153
        %p630 = pneg %p150
        %p631 = pneg %p174
        %p632 = pneg %p171
        %p633 = pneg %p195
        %p634 = pneg %p192
        %p635 = pneg %p216
        %p636 = pneg %p213
        %p637 = pneg %p237
        %p638 = pneg %p234
        %p639 = pneg %p258
        %p640 = pneg %p255
        %p641 = pneg %p279
        %p642 = pneg %p276
        %p643 = pneg %p300
        %p644 = pneg %p297
        %p645 = pneg %p326
        %p646 = pneg %p323
        %s647 = sand.u32 %s313, 1
        %s648 = scalar_lea.sflag [#allocation7], %s647
        %s649 = sand.u32 %s313, 1
        %s650 = smul.addr %s649, 16
        %s651 = scalar_lea.vmem [#allocation16], %s650
        %p653 = scmp.eq.s32.totalorder %s34, 0
        // Predicated region
        $region134: #{tpu_custom_call.1} parent=104 // pred_check
          %p654 = pneg %p653
        $region135: #{tpu_custom_call.1} parent=104 // pred_check_branch
          %656 = sbr.rel (%p654) target = $region137
        $region136: #{tpu_custom_call.1} parent=104 // pred_region
          %vm657 = vcmask 7168
          %658 = vst.msk [vmem:[#allocation2] sm:$0xff] %vm657, -inf
          %659 = vst.msk [vmem:[#allocation2 + $0x8] sm:$0xff] %vm657, -inf
          %660 = vst.msk [vmem:[#allocation2 + $0x10] sm:$0xff] %vm657, -inf
          %661 = vst.msk [vmem:[#allocation2 + $0x18] sm:$0xff] %vm657, -inf
          %662 = vst.msk [vmem:[#allocation2 + $0x20] sm:$0xff] %vm657, -inf
          %663 = vst.msk [vmem:[#allocation2 + $0x28] sm:$0xff] %vm657, -inf
          %664 = vst.msk [vmem:[#allocation2 + $0x30] sm:$0xff] %vm657, -inf
          %665 = vst.msk [vmem:[#allocation2 + $0x38] sm:$0xff] %vm657, -inf
          %666 = vst.msk [vmem:[#allocation3] sm:$0xff] %vm657, 0.0
          %667 = vst.msk [vmem:[#allocation3 + $0x8] sm:$0xff] %vm657, 0.0
          %668 = vst.msk [vmem:[#allocation3 + $0x10] sm:$0xff] %vm657, 0.0
          %669 = vst.msk [vmem:[#allocation3 + $0x18] sm:$0xff] %vm657, 0.0
          %670 = vst.msk [vmem:[#allocation3 + $0x20] sm:$0xff] %vm657, 0.0
          %671 = vst.msk [vmem:[#allocation3 + $0x28] sm:$0xff] %vm657, 0.0
          %672 = vst.msk [vmem:[#allocation3 + $0x30] sm:$0xff] %vm657, 0.0
          %673 = vst.msk [vmem:[#allocation3 + $0x38] sm:$0xff] %vm657, 0.0
          %vm674 = vcmask 261120
          %675 = vst.msk [vmem:[#allocation4] sm:$0xff] %vm674, 0.0
          %676 = vst.msk [vmem:[#allocation4 + $0x8] sm:$0xff] %vm674, 0.0
          %677 = vst.msk [vmem:[#allocation4 + $0x10] sm:$0xff] %vm674, 0.0
          %678 = vst.msk [vmem:[#allocation4 + $0x18] sm:$0xff] %vm674, 0.0
          %679 = vst.msk [vmem:[#allocation4 + $0x20] sm:$0xff] %vm674, 0.0
          %680 = vst.msk [vmem:[#allocation4 + $0x28] sm:$0xff] %vm674, 0.0
          %681 = vst.msk [vmem:[#allocation4 + $0x30] sm:$0xff] %vm674, 0.0
          %682 = vst.msk [vmem:[#allocation4 + $0x38] sm:$0xff] %vm674, 0.0
        $region137: #{tpu_custom_call.1} parent=104 // pred_fallthru
          _
        %v683 = vld [vmem:[%s583] sm:$0xf]
        %v684 = vld [vmem:[%s583 + $0x4] sm:$0xf]
        %v685 = vld [vmem:[%s583 + $0x8] sm:$0xf]
        %v686 = vld [vmem:[%s583 + $0xc] sm:$0xf]
        %v687 = vld [vmem:[%s583 + $0x10] sm:$0xf]
        %v688 = vld [vmem:[%s583 + $0x14] sm:$0xf]
        %v689 = vld [vmem:[%s583 + $0x18] sm:$0xf]
        %v690 = vld [vmem:[%s583 + $0x1c] sm:$0xf]
        %v691 = vld [vmem:[%s583 + $0x20] sm:$0xf]
        %v692 = vld [vmem:[%s583 + $0x24] sm:$0xf]
        %v693 = vld [vmem:[%s583 + $0x28] sm:$0xf]
        %v694 = vld [vmem:[%s583 + $0x2c] sm:$0xf]
        %v695 = vld [vmem:[%s583 + $0x30] sm:$0xf]
        %v696 = vld [vmem:[%s583 + $0x34] sm:$0xf]
        %v697 = vld [vmem:[%s583 + $0x38] sm:$0xf]
        %v698 = vld [vmem:[%s583 + $0x3c] sm:$0xf]
        %v699 = vld [vmem:[%s591] sm:$0xf]
        %v700 = vld [vmem:[%s591 + $0x4] sm:$0xf]
        %v701 = vld [vmem:[%s591 + $0x8] sm:$0xf]
        %v702 = vld [vmem:[%s591 + $0xc] sm:$0xf]
        %v703 = vld [vmem:[%s591 + $0x10] sm:$0xf]
        %v704 = vld [vmem:[%s591 + $0x14] sm:$0xf]
        %v705 = vld [vmem:[%s591 + $0x18] sm:$0xf]
        %v706 = vld [vmem:[%s591 + $0x1c] sm:$0xf]
        %v707 = vld [vmem:[%s591 + $0x20] sm:$0xf]
        %v708 = vld [vmem:[%s591 + $0x24] sm:$0xf]
        %v709 = vld [vmem:[%s591 + $0x28] sm:$0xf]
        %v710 = vld [vmem:[%s591 + $0x2c] sm:$0xf]
        %v711 = vld [vmem:[%s591 + $0x30] sm:$0xf]
        %v712 = vld [vmem:[%s591 + $0x34] sm:$0xf]
        %v713 = vld [vmem:[%s591 + $0x38] sm:$0xf]
        %v714 = vld [vmem:[%s591 + $0x3c] sm:$0xf]
        %v715 = vunpack.c.l.bf16 %v683
        %v716 = vunpack.c.l.bf16 %v684
        %v717 = vunpack.c.l.bf16 %v685
        %v718 = vunpack.c.l.bf16 %v686
        %v719 = vunpack.c.l.bf16 %v687
        %v720 = vunpack.c.l.bf16 %v688
        %v721 = vunpack.c.l.bf16 %v689
        %v722 = vunpack.c.l.bf16 %v690
        %v723 = vunpack.c.l.bf16 %v691
        %v724 = vunpack.c.l.bf16 %v692
        %v725 = vunpack.c.l.bf16 %v693
        %v726 = vunpack.c.l.bf16 %v694
        %v727 = vunpack.c.l.bf16 %v695
        %v728 = vunpack.c.l.bf16 %v696
        %v729 = vunpack.c.l.bf16 %v697
        %v730 = vunpack.c.l.bf16 %v698
        %v731 = vunpack.c.l.bf16 %v699
        %v732 = vunpack.c.l.bf16 %v700
        %v733 = vunpack.c.l.bf16 %v701
        %v734 = vunpack.c.l.bf16 %v702
        %v735 = vunpack.c.l.bf16 %v703
        %v736 = vunpack.c.l.bf16 %v704
        %v737 = vunpack.c.l.bf16 %v705
        %v738 = vunpack.c.l.bf16 %v706
        %v739 = vunpack.c.l.bf16 %v707
        %v740 = vunpack.c.l.bf16 %v708
        %v741 = vunpack.c.l.bf16 %v709
        %v742 = vunpack.c.l.bf16 %v710
        %v743 = vunpack.c.l.bf16 %v711
        %v744 = vunpack.c.l.bf16 %v712
        %v745 = vunpack.c.l.bf16 %v713
        %v746 = vunpack.c.l.bf16 %v714
        %v747 = vadd.f32 %v715, %v731
        %v748 = vadd.f32 %v716, %v732
        %v749 = vadd.f32 %v717, %v733
        %v750 = vadd.f32 %v718, %v734
        %v751 = vadd.f32 %v719, %v735
        %v752 = vadd.f32 %v720, %v736
        %v753 = vadd.f32 %v721, %v737
        %v754 = vadd.f32 %v722, %v738
        %v755 = vadd.f32 %v723, %v739
        %v756 = vadd.f32 %v724, %v740
        %v757 = vadd.f32 %v725, %v741
        %v758 = vadd.f32 %v726, %v742
        %v759 = vadd.f32 %v727, %v743
        %v760 = vadd.f32 %v728, %v744
        %v761 = vadd.f32 %v729, %v745
        %v762 = vadd.f32 %v730, %v746
        %v763 = vpack.c.bf16 %v748, %v747
        %v764 = vpack.c.bf16 %v750, %v749
        %v765 = vpack.c.bf16 %v752, %v751
        %v766 = vpack.c.bf16 %v754, %v753
        %v767 = vpack.c.bf16 %v756, %v755
        %v768 = vpack.c.bf16 %v758, %v757
        %v769 = vpack.c.bf16 %v760, %v759
        %v770 = vpack.c.bf16 %v762, %v761
        %v771 = vld [vmem:[#allocation12] sm:$0xf]
        %v772 = vld [vmem:[#allocation12 + $0x4] sm:$0xf]
        %v773 = vld [vmem:[#allocation12 + $0x8] sm:$0xf]
        %v774 = vld [vmem:[#allocation12 + $0xc] sm:$0xf]
        %v775 = vld [vmem:[#allocation12 + $0x10] sm:$0xf]
        %v776 = vld [vmem:[#allocation12 + $0x14] sm:$0xf]
        %v777 = vld [vmem:[#allocation12 + $0x18] sm:$0xf]
        %v778 = vld [vmem:[#allocation12 + $0x1c] sm:$0xf]
        %v779 = vld [vmem:[#allocation12 + $0x20] sm:$0xf]
        %v780 = vld [vmem:[#allocation12 + $0x24] sm:$0xf]
        %v781 = vld [vmem:[#allocation12 + $0x28] sm:$0xf]
        %v782 = vld [vmem:[#allocation12 + $0x2c] sm:$0xf]
        %v783 = vld [vmem:[#allocation12 + $0x30] sm:$0xf]
        %v784 = vld [vmem:[#allocation12 + $0x34] sm:$0xf]
        %v785 = vld [vmem:[#allocation12 + $0x38] sm:$0xf]
        %v786 = vld [vmem:[#allocation12 + $0x3c] sm:$0xf]
        %v787 = vld [vmem:[%s5] sm:$0xff]
        %v788 = vld [vmem:[%s5 + $0x8] sm:$0xff]
        %v789 = vld [vmem:[%s5 + $0x10] sm:$0xff]
        %v790 = vld [vmem:[%s5 + $0x18] sm:$0xff]
        %v791 = vld [vmem:[%s5 + $0x20] sm:$0xff]
        %v792 = vld [vmem:[%s5 + $0x28] sm:$0xff]
        %v793 = vld [vmem:[%s5 + $0x30] sm:$0xff]
        %v794 = vld [vmem:[%s5 + $0x38] sm:$0xff]
        %v795 = vld [vmem:[%s5 + $0x40] sm:$0xff]
        %v796 = vld [vmem:[%s5 + $0x48] sm:$0xff]
        %v797 = vld [vmem:[%s5 + $0x50] sm:$0xff]
        %v798 = vld [vmem:[%s5 + $0x58] sm:$0xff]
        %v799 = vld [vmem:[%s5 + $0x60] sm:$0xff]
        %v800 = vld [vmem:[%s5 + $0x68] sm:$0xff]
        %v801 = vld [vmem:[%s5 + $0x70] sm:$0xff]
        %v802 = vld [vmem:[%s5 + $0x78] sm:$0xff]
        %804 = vset.pattern.permute.xlu0 0
        %805 = vperm.xlu0 %804, %v787
        %v806 = vpop.permute.xlu0 %805
        %809 = vset.pattern.permute.xlu0 0
        %810 = vperm.xlu0 %809, %v788
        %v811 = vpop.permute.xlu0 %810
        %814 = vset.pattern.permute.xlu0 0
        %815 = vperm.xlu0 %814, %v789
        %v816 = vpop.permute.xlu0 %815
        %819 = vset.pattern.permute.xlu0 0
        %820 = vperm.xlu0 %819, %v790
        %v821 = vpop.permute.xlu0 %820
        %824 = vset.pattern.permute.xlu0 0
        %825 = vperm.xlu0 %824, %v791
        %v826 = vpop.permute.xlu0 %825
        %829 = vset.pattern.permute.xlu0 0
        %830 = vperm.xlu0 %829, %v792
        %v831 = vpop.permute.xlu0 %830
        %834 = vset.pattern.permute.xlu0 0
        %835 = vperm.xlu0 %834, %v793
        %v836 = vpop.permute.xlu0 %835
        %839 = vset.pattern.permute.xlu0 0
        %840 = vperm.xlu0 %839, %v794
        %v841 = vpop.permute.xlu0 %840
        %844 = vset.pattern.permute.xlu0 0
        %845 = vperm.xlu0 %844, %v795
        %v846 = vpop.permute.xlu0 %845
        %849 = vset.pattern.permute.xlu0 0
        %850 = vperm.xlu0 %849, %v796
        %v851 = vpop.permute.xlu0 %850
        %854 = vset.pattern.permute.xlu0 0
        %855 = vperm.xlu0 %854, %v797
        %v856 = vpop.permute.xlu0 %855
        %859 = vset.pattern.permute.xlu0 0
        %860 = vperm.xlu0 %859, %v798
        %v861 = vpop.permute.xlu0 %860
        %864 = vset.pattern.permute.xlu0 0
        %865 = vperm.xlu0 %864, %v799
        %v866 = vpop.permute.xlu0 %865
        %869 = vset.pattern.permute.xlu0 0
        %870 = vperm.xlu0 %869, %v800
        %v871 = vpop.permute.xlu0 %870
        %874 = vset.pattern.permute.xlu0 0
        %875 = vperm.xlu0 %874, %v801
        %v876 = vpop.permute.xlu0 %875
        %879 = vset.pattern.permute.xlu0 0
        %880 = vperm.xlu0 %879, %v802
        %v881 = vpop.permute.xlu0 %880
        %v899 = vunpack.c.l.b16 %v771
        %v900 = vunpack.c.l.b16 %v772
        %v901 = vunpack.c.l.b16 %v773
        %v902 = vunpack.c.l.b16 %v774
        %v903 = vunpack.c.l.b16 %v775
        %v904 = vunpack.c.l.b16 %v776
        %v905 = vunpack.c.l.b16 %v777
        %v906 = vunpack.c.l.b16 %v778
        %v907 = vunpack.c.l.b16 %v779
        %v908 = vunpack.c.l.b16 %v780
        %v909 = vunpack.c.l.b16 %v781
        %v910 = vunpack.c.l.b16 %v782
        %v911 = vunpack.c.l.b16 %v783
        %v912 = vunpack.c.l.b16 %v784
        %v913 = vunpack.c.l.b16 %v785
        %v914 = vunpack.c.l.b16 %v786
        %v915 = vpack.c.b16 %v900, %v899
        %v916 = vpack.c.b16 %v902, %v901
        %v917 = vpack.c.b16 %v904, %v903
        %v918 = vpack.c.b16 %v906, %v905
        %v919 = vpack.c.b16 %v908, %v907
        %v920 = vpack.c.b16 %v910, %v909
        %v921 = vpack.c.b16 %v912, %v911
        %v922 = vpack.c.b16 %v914, %v913
        %931 = vmatpush.bf16.msra.mxu0 %v770
        %932 = vmatpush.bf16.msra.mxu0 %v769
        %933 = vmatpush.bf16.msra.mxu0 %v768
        %934 = vmatpush.bf16.msra.mxu0 %v767
        %935 = vmatpush.bf16.msra.mxu0 %v766
        %936 = vmatpush.bf16.msra.mxu0 %v765
        %937 = vmatpush.bf16.msra.mxu0 %v764
        %938 = vmatpush.bf16.msra.mxu0 %v763
        %939 = vmatmul.bf16.gmra.mxu0 %v915
        %v940 = vpop.f32.mrf.mxu0
        %v941 = vadd.f32 %v806, %v940
        %v942 = vpop.f32.mrf.mxu0
        %v943 = vadd.f32 %v811, %v942
        %944 = vmatmul.bf16.gmra.mxu0 %v916
        %v945 = vpop.f32.mrf.mxu0
        %v946 = vadd.f32 %v816, %v945
        %v947 = vpop.f32.mrf.mxu0
        %v948 = vadd.f32 %v821, %v947
        %949 = vmatmul.bf16.gmra.mxu0 %v917
        %v950 = vpop.f32.mrf.mxu0
        %v951 = vadd.f32 %v826, %v950
        %v952 = vpop.f32.mrf.mxu0
        %v953 = vadd.f32 %v831, %v952
        %954 = vmatmul.bf16.gmra.mxu0 %v918
        %v955 = vpop.f32.mrf.mxu0
        %v956 = vadd.f32 %v836, %v955
        %v957 = vpop.f32.mrf.mxu0
        %v958 = vadd.f32 %v841, %v957
        %959 = vmatmul.bf16.gmra.mxu0 %v919
        %v960 = vpop.f32.mrf.mxu0
        %v961 = vadd.f32 %v846, %v960
        %v962 = vpop.f32.mrf.mxu0
        %v963 = vadd.f32 %v851, %v962
        %964 = vmatmul.bf16.gmra.mxu0 %v920
        %v965 = vpop.f32.mrf.mxu0
        %v966 = vadd.f32 %v856, %v965
        %v967 = vpop.f32.mrf.mxu0
        %v968 = vadd.f32 %v861, %v967
        %969 = vmatmul.bf16.gmra.mxu0 %v921
        %v970 = vpop.f32.mrf.mxu0
        %v971 = vadd.f32 %v866, %v970
        %v972 = vpop.f32.mrf.mxu0
        %v973 = vadd.f32 %v871, %v972
        %974 = vmatmul.bf16.gmra.mxu0 %v922
        %v975 = vpop.f32.mrf.mxu0
        %v976 = vadd.f32 %v876, %v975
        %v977 = vpop.f32.mrf.mxu0
        %v978 = vadd.f32 %v881, %v977
        %979 = vdwg.mxu0
        %v980 = vld [vmem:[#allocation13] sm:$0xf]
        %v981 = vld [vmem:[#allocation13 + $0x4] sm:$0xf]
        %v982 = vld [vmem:[#allocation13 + $0x8] sm:$0xf]
        %v983 = vld [vmem:[#allocation13 + $0xc] sm:$0xf]
        %v984 = vld [vmem:[#allocation13 + $0x10] sm:$0xf]
        %v985 = vld [vmem:[#allocation13 + $0x14] sm:$0xf]
        %v986 = vld [vmem:[#allocation13 + $0x18] sm:$0xf]
        %v987 = vld [vmem:[#allocation13 + $0x1c] sm:$0xf]
        %v988 = vld [vmem:[#allocation13 + $0x20] sm:$0xf]
        %v989 = vld [vmem:[#allocation13 + $0x24] sm:$0xf]
        %v990 = vld [vmem:[#allocation13 + $0x28] sm:$0xf]
        %v991 = vld [vmem:[#allocation13 + $0x2c] sm:$0xf]
        %v992 = vld [vmem:[#allocation13 + $0x30] sm:$0xf]
        %v993 = vld [vmem:[#allocation13 + $0x34] sm:$0xf]
        %v994 = vld [vmem:[#allocation13 + $0x38] sm:$0xf]
        %v995 = vld [vmem:[#allocation13 + $0x3c] sm:$0xf]
        %v996 = vld [vmem:[%s7] sm:$0xff]
        %v997 = vld [vmem:[%s7 + $0x8] sm:$0xff]
        %v998 = vld [vmem:[%s7 + $0x10] sm:$0xff]
        %v999 = vld [vmem:[%s7 + $0x18] sm:$0xff]
        %v1000 = vld [vmem:[%s7 + $0x20] sm:$0xff]
        %v1001 = vld [vmem:[%s7 + $0x28] sm:$0xff]
        %v1002 = vld [vmem:[%s7 + $0x30] sm:$0xff]
        %v1003 = vld [vmem:[%s7 + $0x38] sm:$0xff]
        %v1004 = vld [vmem:[%s7 + $0x40] sm:$0xff]
        %v1005 = vld [vmem:[%s7 + $0x48] sm:$0xff]
        %v1006 = vld [vmem:[%s7 + $0x50] sm:$0xff]
        %v1007 = vld [vmem:[%s7 + $0x58] sm:$0xff]
        %v1008 = vld [vmem:[%s7 + $0x60] sm:$0xff]
        %v1009 = vld [vmem:[%s7 + $0x68] sm:$0xff]
        %v1010 = vld [vmem:[%s7 + $0x70] sm:$0xff]
        %v1011 = vld [vmem:[%s7 + $0x78] sm:$0xff]
        %1013 = vset.pattern.permute.xlu0 0
        %1014 = vperm.xlu0 %1013, %v996
        %v1015 = vpop.permute.xlu0 %1014
        %1018 = vset.pattern.permute.xlu0 0
        %1019 = vperm.xlu0 %1018, %v997
        %v1020 = vpop.permute.xlu0 %1019
        %1023 = vset.pattern.permute.xlu0 0
        %1024 = vperm.xlu0 %1023, %v998
        %v1025 = vpop.permute.xlu0 %1024
        %1028 = vset.pattern.permute.xlu0 0
        %1029 = vperm.xlu0 %1028, %v999
        %v1030 = vpop.permute.xlu0 %1029
        %1033 = vset.pattern.permute.xlu0 0
        %1034 = vperm.xlu0 %1033, %v1000
        %v1035 = vpop.permute.xlu0 %1034
        %1038 = vset.pattern.permute.xlu0 0
        %1039 = vperm.xlu0 %1038, %v1001
        %v1040 = vpop.permute.xlu0 %1039
        %1043 = vset.pattern.permute.xlu0 0
        %1044 = vperm.xlu0 %1043, %v1002
        %v1045 = vpop.permute.xlu0 %1044
        %1048 = vset.pattern.permute.xlu0 0
        %1049 = vperm.xlu0 %1048, %v1003
        %v1050 = vpop.permute.xlu0 %1049
        %1053 = vset.pattern.permute.xlu0 0
        %1054 = vperm.xlu0 %1053, %v1004
        %v1055 = vpop.permute.xlu0 %1054
        %1058 = vset.pattern.permute.xlu0 0
        %1059 = vperm.xlu0 %1058, %v1005
        %v1060 = vpop.permute.xlu0 %1059
        %1063 = vset.pattern.permute.xlu0 0
        %1064 = vperm.xlu0 %1063, %v1006
        %v1065 = vpop.permute.xlu0 %1064
        %1068 = vset.pattern.permute.xlu0 0
        %1069 = vperm.xlu0 %1068, %v1007
        %v1070 = vpop.permute.xlu0 %1069
        %1073 = vset.pattern.permute.xlu0 0
        %1074 = vperm.xlu0 %1073, %v1008
        %v1075 = vpop.permute.xlu0 %1074
        %1078 = vset.pattern.permute.xlu0 0
        %1079 = vperm.xlu0 %1078, %v1009
        %v1080 = vpop.permute.xlu0 %1079
        %1083 = vset.pattern.permute.xlu0 0
        %1084 = vperm.xlu0 %1083, %v1010
        %v1085 = vpop.permute.xlu0 %1084
        %1088 = vset.pattern.permute.xlu0 0
        %1089 = vperm.xlu0 %1088, %v1011
        %v1090 = vpop.permute.xlu0 %1089
        %v1108 = vunpack.c.l.b16 %v980
        %v1109 = vunpack.c.l.b16 %v981
        %v1110 = vunpack.c.l.b16 %v982
        %v1111 = vunpack.c.l.b16 %v983
        %v1112 = vunpack.c.l.b16 %v984
        %v1113 = vunpack.c.l.b16 %v985
        %v1114 = vunpack.c.l.b16 %v986
        %v1115 = vunpack.c.l.b16 %v987
        %v1116 = vunpack.c.l.b16 %v988
        %v1117 = vunpack.c.l.b16 %v989
        %v1118 = vunpack.c.l.b16 %v990
        %v1119 = vunpack.c.l.b16 %v991
        %v1120 = vunpack.c.l.b16 %v992
        %v1121 = vunpack.c.l.b16 %v993
        %v1122 = vunpack.c.l.b16 %v994
        %v1123 = vunpack.c.l.b16 %v995
        %v1124 = vpack.c.b16 %v1109, %v1108
        %v1125 = vpack.c.b16 %v1111, %v1110
        %v1126 = vpack.c.b16 %v1113, %v1112
        %v1127 = vpack.c.b16 %v1115, %v1114
        %v1128 = vpack.c.b16 %v1117, %v1116
        %v1129 = vpack.c.b16 %v1119, %v1118
        %v1130 = vpack.c.b16 %v1121, %v1120
        %v1131 = vpack.c.b16 %v1123, %v1122
        %v1156 = vunpack.c.l.b16 %v683
        %v1157 = vunpack.c.l.b16 %v684
        %v1158 = vunpack.c.l.b16 %v685
        %v1159 = vunpack.c.l.b16 %v686
        %v1160 = vunpack.c.l.b16 %v687
        %v1161 = vunpack.c.l.b16 %v688
        %v1162 = vunpack.c.l.b16 %v689
        %v1163 = vunpack.c.l.b16 %v690
        %v1164 = vunpack.c.l.b16 %v691
        %v1165 = vunpack.c.l.b16 %v692
        %v1166 = vunpack.c.l.b16 %v693
        %v1167 = vunpack.c.l.b16 %v694
        %v1168 = vunpack.c.l.b16 %v695
        %v1169 = vunpack.c.l.b16 %v696
        %v1170 = vunpack.c.l.b16 %v697
        %v1171 = vunpack.c.l.b16 %v698
        %v1172 = vpack.c.b16 %v1157, %v1156
        %v1173 = vpack.c.b16 %v1159, %v1158
        %v1174 = vpack.c.b16 %v1161, %v1160
        %v1175 = vpack.c.b16 %v1163, %v1162
        %v1176 = vpack.c.b16 %v1165, %v1164
        %v1177 = vpack.c.b16 %v1167, %v1166
        %v1178 = vpack.c.b16 %v1169, %v1168
        %v1179 = vpack.c.b16 %v1171, %v1170
        %1188 = vmatpush.bf16.msra.mxu0 %v1179
        %1189 = vmatpush.bf16.msra.mxu0 %v1178
        %1190 = vmatpush.bf16.msra.mxu0 %v1177
        %1191 = vmatpush.bf16.msra.mxu0 %v1176
        %1192 = vmatpush.bf16.msra.mxu0 %v1175
        %1193 = vmatpush.bf16.msra.mxu0 %v1174
        %1194 = vmatpush.bf16.msra.mxu0 %v1173
        %1195 = vmatpush.bf16.msra.mxu0 %v1172
        %1196 = vmatmul.bf16.gmra.mxu0 %v1124
        %v1197 = vpop.f32.mrf.mxu0
        %v1198 = vadd.f32 %v1015, %v1197
        %v1199 = vpop.f32.mrf.mxu0
        %v1200 = vadd.f32 %v1020, %v1199
        %1201 = vmatmul.bf16.gmra.mxu0 %v1125
        %v1202 = vpop.f32.mrf.mxu0
        %v1203 = vadd.f32 %v1025, %v1202
        %v1204 = vpop.f32.mrf.mxu0
        %v1205 = vadd.f32 %v1030, %v1204
        %1206 = vmatmul.bf16.gmra.mxu0 %v1126
        %v1207 = vpop.f32.mrf.mxu0
        %v1208 = vadd.f32 %v1035, %v1207
        %v1209 = vpop.f32.mrf.mxu0
        %v1210 = vadd.f32 %v1040, %v1209
        %1211 = vmatmul.bf16.gmra.mxu0 %v1127
        %v1212 = vpop.f32.mrf.mxu0
        %v1213 = vadd.f32 %v1045, %v1212
        %v1214 = vpop.f32.mrf.mxu0
        %v1215 = vadd.f32 %v1050, %v1214
        %1216 = vmatmul.bf16.gmra.mxu0 %v1128
        %v1217 = vpop.f32.mrf.mxu0
        %v1218 = vadd.f32 %v1055, %v1217
        %v1219 = vpop.f32.mrf.mxu0
        %v1220 = vadd.f32 %v1060, %v1219
        %1221 = vmatmul.bf16.gmra.mxu0 %v1129
        %v1222 = vpop.f32.mrf.mxu0
        %v1223 = vadd.f32 %v1065, %v1222
        %v1224 = vpop.f32.mrf.mxu0
        %v1225 = vadd.f32 %v1070, %v1224
        %1226 = vmatmul.bf16.gmra.mxu0 %v1130
        %v1227 = vpop.f32.mrf.mxu0
        %v1228 = vadd.f32 %v1075, %v1227
        %v1229 = vpop.f32.mrf.mxu0
        %v1230 = vadd.f32 %v1080, %v1229
        %1231 = vmatmul.bf16.gmra.mxu0 %v1131
        %v1232 = vpop.f32.mrf.mxu0
        %v1233 = vadd.f32 %v1085, %v1232
        %v1234 = vpop.f32.mrf.mxu0
        %v1235 = vadd.f32 %v1090, %v1234
        %1236 = vdwg.mxu0
        %v1237 = vpack.c.bf16 %v941, %v941
        %v1238 = vpack.c.bf16 %v943, %v943
        %v1239 = vpack.c.bf16 %v946, %v946
        %v1240 = vpack.c.bf16 %v948, %v948
        %v1241 = vpack.c.bf16 %v951, %v951
        %v1242 = vpack.c.bf16 %v953, %v953
        %v1243 = vpack.c.bf16 %v956, %v956
        %v1244 = vpack.c.bf16 %v958, %v958
        %v1245 = vpack.c.bf16 %v961, %v961
        %v1246 = vpack.c.bf16 %v963, %v963
        %v1247 = vpack.c.bf16 %v966, %v966
        %v1248 = vpack.c.bf16 %v968, %v968
        %v1249 = vpack.c.bf16 %v971, %v971
        %v1250 = vpack.c.bf16 %v973, %v973
        %v1251 = vpack.c.bf16 %v976, %v976
        %v1252 = vpack.c.bf16 %v978, %v978
        %v1253 = vpack.c.bf16 %v1198, %v1198
        %v1254 = vpack.c.bf16 %v1200, %v1200
        %v1255 = vpack.c.bf16 %v1203, %v1203
        %v1256 = vpack.c.bf16 %v1205, %v1205
        %v1257 = vpack.c.bf16 %v1208, %v1208
        %v1258 = vpack.c.bf16 %v1210, %v1210
        %v1259 = vpack.c.bf16 %v1213, %v1213
        %v1260 = vpack.c.bf16 %v1215, %v1215
        %v1261 = vpack.c.bf16 %v1218, %v1218
        %v1262 = vpack.c.bf16 %v1220, %v1220
        %v1263 = vpack.c.bf16 %v1223, %v1223
        %v1264 = vpack.c.bf16 %v1225, %v1225
        %v1265 = vpack.c.bf16 %v1228, %v1228
        %v1266 = vpack.c.bf16 %v1230, %v1230
        %v1267 = vpack.c.bf16 %v1233, %v1233
        %v1268 = vpack.c.bf16 %v1235, %v1235
        %v1269 = vld [vmem:[#allocation5] sm:$0xf]
        %v1270 = vld [vmem:[#allocation5 + $0x4] sm:$0xf]
        %v1271 = vld [vmem:[#allocation5 + $0x8] sm:$0xf]
        %v1272 = vld [vmem:[#allocation5 + $0xc] sm:$0xf]
        %v1273 = vld [vmem:[#allocation5 + $0x10] sm:$0xf]
        %v1274 = vld [vmem:[#allocation5 + $0x14] sm:$0xf]
        %v1275 = vld [vmem:[#allocation5 + $0x18] sm:$0xf]
        %v1276 = vld [vmem:[#allocation5 + $0x1c] sm:$0xf]
        %v1279 = vunpack.c.l.b16 %v1269
        %v1280 = vunpack.c.l.b16 %v1270
        %v1281 = vpack.c.b16 %v1280, %v1279
        %v1286 = vunpack.c.l.b16 %v1237
        %v1287 = vunpack.c.l.b16 %v1238
        %v1288 = vunpack.c.l.b16 %v1239
        %v1289 = vunpack.c.l.b16 %v1240
        %v1290 = vpack.c.b16 %v1287, %v1286
        %v1291 = vpack.c.b16 %v1289, %v1288
        %vm1294 = vcmask 261120
        %v1296 = vsel %vm1294, %v1281, 0
        %1298 = vmatpush.bf16.msra.mxu0 0
        %1299 = vmatpush.bf16.msra.mxu0 0
        %1300 = vmatpush.bf16.msra.mxu0 0
        %1301 = vmatpush.bf16.msra.mxu0 0
        %1302 = vmatpush.bf16.msra.mxu0 0
        %1303 = vmatpush.bf16.msra.mxu0 0
        %1304 = vmatpush.bf16.msra.mxu0 %v1291
        %1305 = vmatpush.bf16.msra.mxu0 %v1290
        %1306 = vmatmul.bf16.gmra.mxu0 %v1296
        %v1307 = vpop.f32.mrf.mxu0
        %v1308 = vadd.f32 0.0, %v1307
        %v1309 = vpop.f32.mrf.mxu0
        %v1310 = vadd.f32 0.0, %v1309
        %1311 = vdwg.mxu0
        %v1314 = vunpack.c.l.b16 %v1271
        %v1315 = vunpack.c.l.b16 %v1272
        %v1316 = vpack.c.b16 %v1315, %v1314
        %v1321 = vunpack.c.l.b16 %v1241
        %v1322 = vunpack.c.l.b16 %v1242
        %v1323 = vunpack.c.l.b16 %v1243
        %v1324 = vunpack.c.l.b16 %v1244
        %v1325 = vpack.c.b16 %v1322, %v1321
        %v1326 = vpack.c.b16 %v1324, %v1323
        %v1330 = vsel %vm1294, %v1316, 0
        %1332 = vmatpush.bf16.msra.mxu0 0
        %1333 = vmatpush.bf16.msra.mxu0 0
        %1334 = vmatpush.bf16.msra.mxu0 0
        %1335 = vmatpush.bf16.msra.mxu0 0
        %1336 = vmatpush.bf16.msra.mxu0 0
        %1337 = vmatpush.bf16.msra.mxu0 0
        %1338 = vmatpush.bf16.msra.mxu0 %v1326
        %1339 = vmatpush.bf16.msra.mxu0 %v1325
        %1340 = vmatmul.bf16.gmra.mxu0 %v1330
        %v1341 = vpop.f32.mrf.mxu0
        %v1342 = vadd.f32 0.0, %v1341
        %v1343 = vpop.f32.mrf.mxu0
        %v1344 = vadd.f32 0.0, %v1343
        %1345 = vdwg.mxu0
        %v1348 = vunpack.c.l.b16 %v1273
        %v1349 = vunpack.c.l.b16 %v1274
        %v1350 = vpack.c.b16 %v1349, %v1348
        %v1355 = vunpack.c.l.b16 %v1245
        %v1356 = vunpack.c.l.b16 %v1246
        %v1357 = vunpack.c.l.b16 %v1247
        %v1358 = vunpack.c.l.b16 %v1248
        %v1359 = vpack.c.b16 %v1356, %v1355
        %v1360 = vpack.c.b16 %v1358, %v1357
        %v1364 = vsel %vm1294, %v1350, 0
        %1366 = vmatpush.bf16.msra.mxu0 0
        %1367 = vmatpush.bf16.msra.mxu0 0
        %1368 = vmatpush.bf16.msra.mxu0 0
        %1369 = vmatpush.bf16.msra.mxu0 0
        %1370 = vmatpush.bf16.msra.mxu0 0
        %1371 = vmatpush.bf16.msra.mxu0 0
        %1372 = vmatpush.bf16.msra.mxu0 %v1360
        %1373 = vmatpush.bf16.msra.mxu0 %v1359
        %1374 = vmatmul.bf16.gmra.mxu0 %v1364
        %v1375 = vpop.f32.mrf.mxu0
        %v1376 = vadd.f32 0.0, %v1375
        %v1377 = vpop.f32.mrf.mxu0
        %v1378 = vadd.f32 0.0, %v1377
        %1379 = vdwg.mxu0
        %v1382 = vunpack.c.l.b16 %v1275
        %v1383 = vunpack.c.l.b16 %v1276
        %v1384 = vpack.c.b16 %v1383, %v1382
        %v1389 = vunpack.c.l.b16 %v1249
        %v1390 = vunpack.c.l.b16 %v1250
        %v1391 = vunpack.c.l.b16 %v1251
        %v1392 = vunpack.c.l.b16 %v1252
        %v1393 = vpack.c.b16 %v1390, %v1389
        %v1394 = vpack.c.b16 %v1392, %v1391
        %v1398 = vsel %vm1294, %v1384, 0
        %1400 = vmatpush.bf16.msra.mxu0 0
        %1401 = vmatpush.bf16.msra.mxu0 0
        %1402 = vmatpush.bf16.msra.mxu0 0
        %1403 = vmatpush.bf16.msra.mxu0 0
        %1404 = vmatpush.bf16.msra.mxu0 0
        %1405 = vmatpush.bf16.msra.mxu0 0
        %1406 = vmatpush.bf16.msra.mxu0 %v1394
        %1407 = vmatpush.bf16.msra.mxu0 %v1393
        %1408 = vmatmul.bf16.gmra.mxu0 %v1398
        %v1409 = vpop.f32.mrf.mxu0
        %v1410 = vadd.f32 0.0, %v1409
        %v1411 = vpop.f32.mrf.mxu0
        %v1412 = vadd.f32 0.0, %v1411
        %1413 = vdwg.mxu0
        %v1414 = vld [vmem:[#allocation2] sm:$0xff]
        %v1415 = vld [vmem:[#allocation2 + $0x8] sm:$0xff]
        %v1416 = vld [vmem:[#allocation2 + $0x10] sm:$0xff]
        %v1417 = vld [vmem:[#allocation2 + $0x18] sm:$0xff]
        %v1418 = vld [vmem:[#allocation2 + $0x20] sm:$0xff]
        %v1419 = vld [vmem:[#allocation2 + $0x28] sm:$0xff]
        %v1420 = vld [vmem:[#allocation2 + $0x30] sm:$0xff]
        %v1421 = vld [vmem:[#allocation2 + $0x38] sm:$0xff]
        %1422 = vmax.xlane.f32.xlu0 %v1308
        %v1423 = vpop.xlane.xlu0 %1422
        %1424 = vmax.xlane.f32.xlu0 %v1310
        %v1425 = vpop.xlane.xlu0 %1424
        %1426 = vmax.xlane.f32.xlu0 %v1342
        %v1427 = vpop.xlane.xlu0 %1426
        %1428 = vmax.xlane.f32.xlu0 %v1344
        %v1429 = vpop.xlane.xlu0 %1428
        %1430 = vmax.xlane.f32.xlu0 %v1376
        %v1431 = vpop.xlane.xlu0 %1430
        %1432 = vmax.xlane.f32.xlu0 %v1378
        %v1433 = vpop.xlane.xlu0 %1432
        %1434 = vmax.xlane.f32.xlu0 %v1410
        %v1435 = vpop.xlane.xlu0 %1434
        %1436 = vmax.xlane.f32.xlu0 %v1412
        %v1437 = vpop.xlane.xlu0 %1436
        %v1438 = vmax.f32 %v1414, %v1423
        %v1439 = vmax.f32 %v1415, %v1425
        %v1440 = vmax.f32 %v1416, %v1427
        %v1441 = vmax.f32 %v1417, %v1429
        %v1442 = vmax.f32 %v1418, %v1431
        %v1443 = vmax.f32 %v1419, %v1433
        %v1444 = vmax.f32 %v1420, %v1435
        %v1445 = vmax.f32 %v1421, %v1437
        %v1446 = vsub.f32 %v1414, %v1438
        %v1447 = vsub.f32 %v1415, %v1439
        %v1448 = vsub.f32 %v1416, %v1440
        %v1449 = vsub.f32 %v1417, %v1441
        %v1450 = vsub.f32 %v1418, %v1442
        %v1451 = vsub.f32 %v1419, %v1443
        %v1452 = vsub.f32 %v1420, %v1444
        %v1453 = vsub.f32 %v1421, %v1445
        %v1454 = vmul.f32 %v1446, 1.442695
        %v1455 = vpow.pop %v1454
        %v1456 = vmul.f32 %v1447, 1.442695
        %v1457 = vpow.pop %v1456
        %v1458 = vmul.f32 %v1448, 1.442695
        %v1459 = vpow.pop %v1458
        %v1460 = vmul.f32 %v1449, 1.442695
        %v1461 = vpow.pop %v1460
        %v1462 = vmul.f32 %v1450, 1.442695
        %v1463 = vpow.pop %v1462
        %v1464 = vmul.f32 %v1451, 1.442695
        %v1465 = vpow.pop %v1464
        %v1466 = vmul.f32 %v1452, 1.442695
        %v1467 = vpow.pop %v1466
        %v1468 = vmul.f32 %v1453, 1.442695
        %v1469 = vpow.pop %v1468
        %1471 = vset.pattern.permute.xlu0 0
        %1472 = vperm.xlu0 %1471, %v1438
        %v1473 = vpop.permute.xlu0 %1472
        %1476 = vset.pattern.permute.xlu0 0
        %1477 = vperm.xlu0 %1476, %v1439
        %v1478 = vpop.permute.xlu0 %1477
        %1481 = vset.pattern.permute.xlu0 0
        %1482 = vperm.xlu0 %1481, %v1440
        %v1483 = vpop.permute.xlu0 %1482
        %1486 = vset.pattern.permute.xlu0 0
        %1487 = vperm.xlu0 %1486, %v1441
        %v1488 = vpop.permute.xlu0 %1487
        %1491 = vset.pattern.permute.xlu0 0
        %1492 = vperm.xlu0 %1491, %v1442
        %v1493 = vpop.permute.xlu0 %1492
        %1496 = vset.pattern.permute.xlu0 0
        %1497 = vperm.xlu0 %1496, %v1443
        %v1498 = vpop.permute.xlu0 %1497
        %1501 = vset.pattern.permute.xlu0 0
        %1502 = vperm.xlu0 %1501, %v1444
        %v1503 = vpop.permute.xlu0 %1502
        %1506 = vset.pattern.permute.xlu0 0
        %1507 = vperm.xlu0 %1506, %v1445
        %v1508 = vpop.permute.xlu0 %1507
        %v1510 = vsub.f32 %v1308, %v1473
        %v1511 = vsub.f32 %v1310, %v1478
        %v1512 = vsub.f32 %v1342, %v1483
        %v1513 = vsub.f32 %v1344, %v1488
        %v1514 = vsub.f32 %v1376, %v1493
        %v1515 = vsub.f32 %v1378, %v1498
        %v1516 = vsub.f32 %v1410, %v1503
        %v1517 = vsub.f32 %v1412, %v1508
        %v1518 = vmul.f32 %v1510, 1.442695
        %v1519 = vpow.pop %v1518
        %v1520 = vmul.f32 %v1511, 1.442695
        %v1521 = vpow.pop %v1520
        %v1522 = vmul.f32 %v1512, 1.442695
        %v1523 = vpow.pop %v1522
        %v1524 = vmul.f32 %v1513, 1.442695
        %v1525 = vpow.pop %v1524
        %v1526 = vmul.f32 %v1514, 1.442695
        %v1527 = vpow.pop %v1526
        %v1528 = vmul.f32 %v1515, 1.442695
        %v1529 = vpow.pop %v1528
        %v1530 = vmul.f32 %v1516, 1.442695
        %v1531 = vpow.pop %v1530
        %v1532 = vmul.f32 %v1517, 1.442695
        %v1533 = vpow.pop %v1532
        %v1534 = vld [vmem:[#allocation3] sm:$0xff]
        %v1535 = vld [vmem:[#allocation3 + $0x8] sm:$0xff]
        %v1536 = vld [vmem:[#allocation3 + $0x10] sm:$0xff]
        %v1537 = vld [vmem:[#allocation3 + $0x18] sm:$0xff]
        %v1538 = vld [vmem:[#allocation3 + $0x20] sm:$0xff]
        %v1539 = vld [vmem:[#allocation3 + $0x28] sm:$0xff]
        %v1540 = vld [vmem:[#allocation3 + $0x30] sm:$0xff]
        %v1541 = vld [vmem:[#allocation3 + $0x38] sm:$0xff]
        %v1542 = vmul.f32 %v1455, %v1534
        %v1543 = vmul.f32 %v1457, %v1535
        %v1544 = vmul.f32 %v1459, %v1536
        %v1545 = vmul.f32 %v1461, %v1537
        %v1546 = vmul.f32 %v1463, %v1538
        %v1547 = vmul.f32 %v1465, %v1539
        %v1548 = vmul.f32 %v1467, %v1540
        %v1549 = vmul.f32 %v1469, %v1541
        %1550 = vadd.xlane.f32.xlu0 %v1519
        %v1551 = vpop.xlane.xlu0 %1550
        %1552 = vadd.xlane.f32.xlu0 %v1521
        %v1553 = vpop.xlane.xlu0 %1552
        %1554 = vadd.xlane.f32.xlu0 %v1523
        %v1555 = vpop.xlane.xlu0 %1554
        %1556 = vadd.xlane.f32.xlu0 %v1525
        %v1557 = vpop.xlane.xlu0 %1556
        %1558 = vadd.xlane.f32.xlu0 %v1527
        %v1559 = vpop.xlane.xlu0 %1558
        %1560 = vadd.xlane.f32.xlu0 %v1529
        %v1561 = vpop.xlane.xlu0 %1560
        %1562 = vadd.xlane.f32.xlu0 %v1531
        %v1563 = vpop.xlane.xlu0 %1562
        %1564 = vadd.xlane.f32.xlu0 %v1533
        %v1565 = vpop.xlane.xlu0 %1564
        %v1566 = vadd.f32 %v1542, %v1551
        %v1567 = vadd.f32 %v1543, %v1553
        %v1568 = vadd.f32 %v1544, %v1555
        %v1569 = vadd.f32 %v1545, %v1557
        %v1570 = vadd.f32 %v1546, %v1559
        %v1571 = vadd.f32 %v1547, %v1561
        %v1572 = vadd.f32 %v1548, %v1563
        %v1573 = vadd.f32 %v1549, %v1565
        %vm1574 = vcmask 7168
        %1575 = vst.msk [vmem:[#allocation3] sm:$0xff] %vm1574, %v1566
        %1576 = vst.msk [vmem:[#allocation3 + $0x8] sm:$0xff] %vm1574, %v1567
        %1577 = vst.msk [vmem:[#allocation3 + $0x10] sm:$0xff] %vm1574, %v1568
        %1578 = vst.msk [vmem:[#allocation3 + $0x18] sm:$0xff] %vm1574, %v1569
        %1579 = vst.msk [vmem:[#allocation3 + $0x20] sm:$0xff] %vm1574, %v1570
        %1580 = vst.msk [vmem:[#allocation3 + $0x28] sm:$0xff] %vm1574, %v1571
        %1581 = vst.msk [vmem:[#allocation3 + $0x30] sm:$0xff] %vm1574, %v1572
        %1582 = vst.msk [vmem:[#allocation3 + $0x38] sm:$0xff] %vm1574, %v1573
        %v1583 = vpack.c.bf16 %v1519, %v1519
        %v1584 = vpack.c.bf16 %v1521, %v1521
        %v1585 = vpack.c.bf16 %v1523, %v1523
        %v1586 = vpack.c.bf16 %v1525, %v1525
        %v1587 = vpack.c.bf16 %v1527, %v1527
        %v1588 = vpack.c.bf16 %v1529, %v1529
        %v1589 = vpack.c.bf16 %v1531, %v1531
        %v1590 = vpack.c.bf16 %v1533, %v1533
        %v1593 = vunpack.c.l.b16 %v1583
        %v1594 = vunpack.c.l.b16 %v1584
        %v1595 = vpack.c.b16 %v1594, %v1593
        %v1601 = vunpack.c.l.b16 %v1253
        %v1602 = vunpack.c.l.b16 %v1254
        %v1603 = vunpack.c.l.b16 %v1255
        %v1604 = vunpack.c.l.b16 %v1256
        %v1605 = vpack.c.b16 %v1602, %v1601
        %v1606 = vpack.c.b16 %v1604, %v1603
        %1609 = vmatpush.bf16.xpose.msra.mxu0 0
        %1610 = vmatpush.bf16.xpose.msra.mxu0 0
        %1611 = vmatpush.bf16.xpose.msra.mxu0 0
        %1612 = vmatpush.bf16.xpose.msra.mxu0 0
        %1613 = vmatpush.bf16.xpose.msra.mxu0 0
        %1614 = vmatpush.bf16.xpose.msra.mxu0 0
        %1615 = vmatpush.bf16.xpose.msra.mxu0 %v1606
        %1616 = vmatpush.bf16.xpose.msra.mxu0 %v1605
        %1617 = vmatmul.bf16.gmra.mxu0 %v1595
        %v1618 = vpop.f32.mrf.mxu0
        %v1619 = vadd.f32 0.0, %v1618
        %v1620 = vpop.f32.mrf.mxu0
        %v1621 = vadd.f32 0.0, %v1620
        %1622 = vdwg.mxu0
        %v1625 = vunpack.c.l.b16 %v1585
        %v1626 = vunpack.c.l.b16 %v1586
        %v1627 = vpack.c.b16 %v1626, %v1625
        %v1633 = vunpack.c.l.b16 %v1257
        %v1634 = vunpack.c.l.b16 %v1258
        %v1635 = vunpack.c.l.b16 %v1259
        %v1636 = vunpack.c.l.b16 %v1260
        %v1637 = vpack.c.b16 %v1634, %v1633
        %v1638 = vpack.c.b16 %v1636, %v1635
        %1641 = vmatpush.bf16.xpose.msra.mxu0 0
        %1642 = vmatpush.bf16.xpose.msra.mxu0 0
        %1643 = vmatpush.bf16.xpose.msra.mxu0 0
        %1644 = vmatpush.bf16.xpose.msra.mxu0 0
        %1645 = vmatpush.bf16.xpose.msra.mxu0 0
        %1646 = vmatpush.bf16.xpose.msra.mxu0 0
        %1647 = vmatpush.bf16.xpose.msra.mxu0 %v1638
        %1648 = vmatpush.bf16.xpose.msra.mxu0 %v1637
        %1649 = vmatmul.bf16.gmra.mxu0 %v1627
        %v1650 = vpop.f32.mrf.mxu0
        %v1651 = vadd.f32 0.0, %v1650
        %v1652 = vpop.f32.mrf.mxu0
        %v1653 = vadd.f32 0.0, %v1652
        %1654 = vdwg.mxu0
        %v1657 = vunpack.c.l.b16 %v1587
        %v1658 = vunpack.c.l.b16 %v1588
        %v1659 = vpack.c.b16 %v1658, %v1657
        %v1665 = vunpack.c.l.b16 %v1261
        %v1666 = vunpack.c.l.b16 %v1262
        %v1667 = vunpack.c.l.b16 %v1263
        %v1668 = vunpack.c.l.b16 %v1264
        %v1669 = vpack.c.b16 %v1666, %v1665
        %v1670 = vpack.c.b16 %v1668, %v1667
        %1673 = vmatpush.bf16.xpose.msra.mxu0 0
        %1674 = vmatpush.bf16.xpose.msra.mxu0 0
        %1675 = vmatpush.bf16.xpose.msra.mxu0 0
        %1676 = vmatpush.bf16.xpose.msra.mxu0 0
        %1677 = vmatpush.bf16.xpose.msra.mxu0 0
        %1678 = vmatpush.bf16.xpose.msra.mxu0 0
        %1679 = vmatpush.bf16.xpose.msra.mxu0 %v1670
        %1680 = vmatpush.bf16.xpose.msra.mxu0 %v1669
        %1681 = vmatmul.bf16.gmra.mxu0 %v1659
        %v1682 = vpop.f32.mrf.mxu0
        %v1683 = vadd.f32 0.0, %v1682
        %v1684 = vpop.f32.mrf.mxu0
        %v1685 = vadd.f32 0.0, %v1684
        %1686 = vdwg.mxu0
        %v1689 = vunpack.c.l.b16 %v1589
        %v1690 = vunpack.c.l.b16 %v1590
        %v1691 = vpack.c.b16 %v1690, %v1689
        %v1697 = vunpack.c.l.b16 %v1265
        %v1698 = vunpack.c.l.b16 %v1266
        %v1699 = vunpack.c.l.b16 %v1267
        %v1700 = vunpack.c.l.b16 %v1268
        %v1701 = vpack.c.b16 %v1698, %v1697
        %v1702 = vpack.c.b16 %v1700, %v1699
        %1705 = vmatpush.bf16.xpose.msra.mxu0 0
        %1706 = vmatpush.bf16.xpose.msra.mxu0 0
        %1707 = vmatpush.bf16.xpose.msra.mxu0 0
        %1708 = vmatpush.bf16.xpose.msra.mxu0 0
        %1709 = vmatpush.bf16.xpose.msra.mxu0 0
        %1710 = vmatpush.bf16.xpose.msra.mxu0 0
        %1711 = vmatpush.bf16.xpose.msra.mxu0 %v1702
        %1712 = vmatpush.bf16.xpose.msra.mxu0 %v1701
        %1713 = vmatmul.bf16.gmra.mxu0 %v1691
        %v1714 = vpop.f32.mrf.mxu0
        %v1715 = vadd.f32 0.0, %v1714
        %v1716 = vpop.f32.mrf.mxu0
        %v1717 = vadd.f32 0.0, %v1716
        %1718 = vdwg.mxu0
        %v1719 = vld [vmem:[#allocation4] sm:$0xff]
        %v1720 = vld [vmem:[#allocation4 + $0x8] sm:$0xff]
        %v1721 = vld [vmem:[#allocation4 + $0x10] sm:$0xff]
        %v1722 = vld [vmem:[#allocation4 + $0x18] sm:$0xff]
        %v1723 = vld [vmem:[#allocation4 + $0x20] sm:$0xff]
        %v1724 = vld [vmem:[#allocation4 + $0x28] sm:$0xff]
        %v1725 = vld [vmem:[#allocation4 + $0x30] sm:$0xff]
        %v1726 = vld [vmem:[#allocation4 + $0x38] sm:$0xff]
        %1728 = vset.pattern.permute.xlu0 0
        %1729 = vperm.xlu0 %1728, %v1455
        %v1730 = vpop.permute.xlu0 %1729
        %1733 = vset.pattern.permute.xlu0 0
        %1734 = vperm.xlu0 %1733, %v1457
        %v1735 = vpop.permute.xlu0 %1734
        %1738 = vset.pattern.permute.xlu0 0
        %1739 = vperm.xlu0 %1738, %v1459
        %v1740 = vpop.permute.xlu0 %1739
        %1743 = vset.pattern.permute.xlu0 0
        %1744 = vperm.xlu0 %1743, %v1461
        %v1745 = vpop.permute.xlu0 %1744
        %1748 = vset.pattern.permute.xlu0 0
        %1749 = vperm.xlu0 %1748, %v1463
        %v1750 = vpop.permute.xlu0 %1749
        %1753 = vset.pattern.permute.xlu0 0
        %1754 = vperm.xlu0 %1753, %v1465
        %v1755 = vpop.permute.xlu0 %1754
        %1758 = vset.pattern.permute.xlu0 0
        %1759 = vperm.xlu0 %1758, %v1467
        %v1760 = vpop.permute.xlu0 %1759
        %1763 = vset.pattern.permute.xlu0 0
        %1764 = vperm.xlu0 %1763, %v1469
        %v1765 = vpop.permute.xlu0 %1764
        %v1767 = vmul.f32 %v1730, %v1719
        %v1768 = vmul.f32 %v1735, %v1720
        %v1769 = vmul.f32 %v1740, %v1721
        %v1770 = vmul.f32 %v1745, %v1722
        %v1771 = vmul.f32 %v1750, %v1723
        %v1772 = vmul.f32 %v1755, %v1724
        %v1773 = vmul.f32 %v1760, %v1725
        %v1774 = vmul.f32 %v1765, %v1726
        %v1775 = vadd.f32 %v1767, %v1619
        %v1776 = vadd.f32 %v1768, %v1621
        %v1777 = vadd.f32 %v1769, %v1651
        %v1778 = vadd.f32 %v1770, %v1653
        %v1779 = vadd.f32 %v1771, %v1683
        %v1780 = vadd.f32 %v1772, %v1685
        %v1781 = vadd.f32 %v1773, %v1715
        %v1782 = vadd.f32 %v1774, %v1717
        %1783 = vst.msk [vmem:[#allocation4] sm:$0xff] %vm1294, %v1775
        %1784 = vst.msk [vmem:[#allocation4 + $0x8] sm:$0xff] %vm1294, %v1776
        %1785 = vst.msk [vmem:[#allocation4 + $0x10] sm:$0xff] %vm1294, %v1777
        %1786 = vst.msk [vmem:[#allocation4 + $0x18] sm:$0xff] %vm1294, %v1778
        %1787 = vst.msk [vmem:[#allocation4 + $0x20] sm:$0xff] %vm1294, %v1779
        %1788 = vst.msk [vmem:[#allocation4 + $0x28] sm:$0xff] %vm1294, %v1780
        %1789 = vst.msk [vmem:[#allocation4 + $0x30] sm:$0xff] %vm1294, %v1781
        %1790 = vst.msk [vmem:[#allocation4 + $0x38] sm:$0xff] %vm1294, %v1782
        %1791 = vst.msk [vmem:[#allocation2] sm:$0xff] %vm1574, %v1438
        %1792 = vst.msk [vmem:[#allocation2 + $0x8] sm:$0xff] %vm1574, %v1439
        %1793 = vst.msk [vmem:[#allocation2 + $0x10] sm:$0xff] %vm1574, %v1440
        %1794 = vst.msk [vmem:[#allocation2 + $0x18] sm:$0xff] %vm1574, %v1441
        %1795 = vst.msk [vmem:[#allocation2 + $0x20] sm:$0xff] %vm1574, %v1442
        %1796 = vst.msk [vmem:[#allocation2 + $0x28] sm:$0xff] %vm1574, %v1443
        %1797 = vst.msk [vmem:[#allocation2 + $0x30] sm:$0xff] %vm1574, %v1444
        %1798 = vst.msk [vmem:[#allocation2 + $0x38] sm:$0xff] %vm1574, %v1445
        %p1799 = scmp.eq.s32.totalorder %s34, 1
        // Predicated region
        $region138: #{tpu_custom_call.1} parent=104 // pred_check
          %p1800 = pneg %p1799
        $region139: #{tpu_custom_call.1} parent=104 // pred_check_branch
          %1802 = sbr.rel (%p1800) target = $region141
        $region140: #{tpu_custom_call.1} parent=104 // pred_region
          %v1803 = vld [vmem:[#allocation4] sm:$0xff]
          %v1804 = vld [vmem:[#allocation4 + $0x8] sm:$0xff]
          %v1805 = vld [vmem:[#allocation4 + $0x10] sm:$0xff]
          %v1806 = vld [vmem:[#allocation4 + $0x18] sm:$0xff]
          %v1807 = vld [vmem:[#allocation4 + $0x20] sm:$0xff]
          %v1808 = vld [vmem:[#allocation4 + $0x28] sm:$0xff]
          %v1809 = vld [vmem:[#allocation4 + $0x30] sm:$0xff]
          %v1810 = vld [vmem:[#allocation4 + $0x38] sm:$0xff]
          %v1811 = vld [vmem:[#allocation3] sm:$0xff]
          %v1812 = vld [vmem:[#allocation3 + $0x8] sm:$0xff]
          %v1813 = vld [vmem:[#allocation3 + $0x10] sm:$0xff]
          %v1814 = vld [vmem:[#allocation3 + $0x18] sm:$0xff]
          %v1815 = vld [vmem:[#allocation3 + $0x20] sm:$0xff]
          %v1816 = vld [vmem:[#allocation3 + $0x28] sm:$0xff]
          %v1817 = vld [vmem:[#allocation3 + $0x30] sm:$0xff]
          %v1818 = vld [vmem:[#allocation3 + $0x38] sm:$0xff]
          %v1819 = vrcp.pop %v1811
          %v1820 = vrcp.pop %v1812
          %v1821 = vrcp.pop %v1813
          %v1822 = vrcp.pop %v1814
          %v1823 = vrcp.pop %v1815
          %v1824 = vrcp.pop %v1816
          %v1825 = vrcp.pop %v1817
          %v1826 = vrcp.pop %v1818
          %1828 = vset.pattern.permute.xlu0 0
          %1829 = vperm.xlu0 %1828, %v1819
          %v1830 = vpop.permute.xlu0 %1829
          %1833 = vset.pattern.permute.xlu0 0
          %1834 = vperm.xlu0 %1833, %v1820
          %v1835 = vpop.permute.xlu0 %1834
          %1838 = vset.pattern.permute.xlu0 0
          %1839 = vperm.xlu0 %1838, %v1821
          %v1840 = vpop.permute.xlu0 %1839
          %1843 = vset.pattern.permute.xlu0 0
          %1844 = vperm.xlu0 %1843, %v1822
          %v1845 = vpop.permute.xlu0 %1844
          %1848 = vset.pattern.permute.xlu0 0
          %1849 = vperm.xlu0 %1848, %v1823
          %v1850 = vpop.permute.xlu0 %1849
          %1853 = vset.pattern.permute.xlu0 0
          %1854 = vperm.xlu0 %1853, %v1824
          %v1855 = vpop.permute.xlu0 %1854
          %1858 = vset.pattern.permute.xlu0 0
          %1859 = vperm.xlu0 %1858, %v1825
          %v1860 = vpop.permute.xlu0 %1859
          %1863 = vset.pattern.permute.xlu0 0
          %1864 = vperm.xlu0 %1863, %v1826
          %v1865 = vpop.permute.xlu0 %1864
          %v1867 = vmul.f32 %v1803, %v1830
          %v1868 = vmul.f32 %v1804, %v1835
          %v1869 = vmul.f32 %v1805, %v1840
          %v1870 = vmul.f32 %v1806, %v1845
          %v1871 = vmul.f32 %v1807, %v1850
          %v1872 = vmul.f32 %v1808, %v1855
          %v1873 = vmul.f32 %v1809, %v1860
          %v1874 = vmul.f32 %v1810, %v1865
          %v1875 = vpack.c.bf16 %v1867, %v1867
          %v1876 = vpack.c.bf16 %v1868, %v1868
          %v1877 = vpack.c.bf16 %v1869, %v1869
          %v1878 = vpack.c.bf16 %v1870, %v1870
          %v1879 = vpack.c.bf16 %v1871, %v1871
          %v1880 = vpack.c.bf16 %v1872, %v1872
          %v1881 = vpack.c.bf16 %v1873, %v1873
          %v1882 = vpack.c.bf16 %v1874, %v1874
          %v1883 = vld [vmem:[#allocation15] sm:$0xf]
          %v1884 = vld [vmem:[#allocation15 + $0x4] sm:$0xf]
          %v1885 = vld [vmem:[#allocation15 + $0x8] sm:$0xf]
          %v1886 = vld [vmem:[#allocation15 + $0xc] sm:$0xf]
          %v1887 = vld [vmem:[#allocation15 + $0x10] sm:$0xf]
          %v1888 = vld [vmem:[#allocation15 + $0x14] sm:$0xf]
          %v1889 = vld [vmem:[#allocation15 + $0x18] sm:$0xf]
          %v1890 = vld [vmem:[#allocation15 + $0x1c] sm:$0xf]
          %v1891 = vld [vmem:[#allocation15 + $0x20] sm:$0xf]
          %v1892 = vld [vmem:[#allocation15 + $0x24] sm:$0xf]
          %v1893 = vld [vmem:[#allocation15 + $0x28] sm:$0xf]
          %v1894 = vld [vmem:[#allocation15 + $0x2c] sm:$0xf]
          %v1895 = vld [vmem:[#allocation15 + $0x30] sm:$0xf]
          %v1896 = vld [vmem:[#allocation15 + $0x34] sm:$0xf]
          %v1897 = vld [vmem:[#allocation15 + $0x38] sm:$0xf]
          %v1898 = vld [vmem:[#allocation15 + $0x3c] sm:$0xf]
          %v1901 = vunpack.c.l.b16 %v1875
          %v1902 = vunpack.c.l.b16 %v1876
          %v1903 = vpack.c.b16 %v1902, %v1901
          %v1908 = vunpack.c.l.b16 %v1883
          %v1909 = vunpack.c.l.b16 %v1884
          %v1910 = vunpack.c.l.b16 %v1885
          %v1911 = vunpack.c.l.b16 %v1886
          %v1912 = vpack.c.b16 %v1909, %v1908
          %v1913 = vpack.c.b16 %v1911, %v1910
          %v1917 = vsel %vm1294, %v1903, 0
          %1919 = vmatpush.bf16.msra.mxu0 0
          %1920 = vmatpush.bf16.msra.mxu0 0
          %1921 = vmatpush.bf16.msra.mxu0 0
          %1922 = vmatpush.bf16.msra.mxu0 0
          %1923 = vmatpush.bf16.msra.mxu0 0
          %1924 = vmatpush.bf16.msra.mxu0 0
          %1925 = vmatpush.bf16.msra.mxu0 %v1913
          %1926 = vmatpush.bf16.msra.mxu0 %v1912
          %1927 = vmatmul.bf16.gmra.mxu0 %v1917
          %v1928 = vpop.f32.mrf.mxu0
          %v1929 = vadd.f32 0.0, %v1928
          %v1930 = vpop.f32.mrf.mxu0
          %v1931 = vadd.f32 0.0, %v1930
          %1932 = vdwg.mxu0
          %v1935 = vunpack.c.l.b16 %v1877
          %v1936 = vunpack.c.l.b16 %v1878
          %v1937 = vpack.c.b16 %v1936, %v1935
          %v1942 = vunpack.c.l.b16 %v1887
          %v1943 = vunpack.c.l.b16 %v1888
          %v1944 = vunpack.c.l.b16 %v1889
          %v1945 = vunpack.c.l.b16 %v1890
          %v1946 = vpack.c.b16 %v1943, %v1942
          %v1947 = vpack.c.b16 %v1945, %v1944
          %v1951 = vsel %vm1294, %v1937, 0
          %1953 = vmatpush.bf16.msra.mxu0 0
          %1954 = vmatpush.bf16.msra.mxu0 0
          %1955 = vmatpush.bf16.msra.mxu0 0
          %1956 = vmatpush.bf16.msra.mxu0 0
          %1957 = vmatpush.bf16.msra.mxu0 0
          %1958 = vmatpush.bf16.msra.mxu0 0
          %1959 = vmatpush.bf16.msra.mxu0 %v1947
          %1960 = vmatpush.bf16.msra.mxu0 %v1946
          %1961 = vmatmul.bf16.gmra.mxu0 %v1951
          %v1962 = vpop.f32.mrf.mxu0
          %v1963 = vadd.f32 0.0, %v1962
          %v1964 = vpop.f32.mrf.mxu0
          %v1965 = vadd.f32 0.0, %v1964
          %1966 = vdwg.mxu0
          %v1969 = vunpack.c.l.b16 %v1879
          %v1970 = vunpack.c.l.b16 %v1880
          %v1971 = vpack.c.b16 %v1970, %v1969
          %v1976 = vunpack.c.l.b16 %v1891
          %v1977 = vunpack.c.l.b16 %v1892
          %v1978 = vunpack.c.l.b16 %v1893
          %v1979 = vunpack.c.l.b16 %v1894
          %v1980 = vpack.c.b16 %v1977, %v1976
          %v1981 = vpack.c.b16 %v1979, %v1978
          %v1985 = vsel %vm1294, %v1971, 0
          %1987 = vmatpush.bf16.msra.mxu0 0
          %1988 = vmatpush.bf16.msra.mxu0 0
          %1989 = vmatpush.bf16.msra.mxu0 0
          %1990 = vmatpush.bf16.msra.mxu0 0
          %1991 = vmatpush.bf16.msra.mxu0 0
          %1992 = vmatpush.bf16.msra.mxu0 0
          %1993 = vmatpush.bf16.msra.mxu0 %v1981
          %1994 = vmatpush.bf16.msra.mxu0 %v1980
          %1995 = vmatmul.bf16.gmra.mxu0 %v1985
          %v1996 = vpop.f32.mrf.mxu0
          %v1997 = vadd.f32 0.0, %v1996
          %v1998 = vpop.f32.mrf.mxu0
          %v1999 = vadd.f32 0.0, %v1998
          %2000 = vdwg.mxu0
          %v2003 = vunpack.c.l.b16 %v1881
          %v2004 = vunpack.c.l.b16 %v1882
          %v2005 = vpack.c.b16 %v2004, %v2003
          %v2010 = vunpack.c.l.b16 %v1895
          %v2011 = vunpack.c.l.b16 %v1896
          %v2012 = vunpack.c.l.b16 %v1897
          %v2013 = vunpack.c.l.b16 %v1898
          %v2014 = vpack.c.b16 %v2011, %v2010
          %v2015 = vpack.c.b16 %v2013, %v2012
          %v2019 = vsel %vm1294, %v2005, 0
          %2021 = vmatpush.bf16.msra.mxu0 0
          %2022 = vmatpush.bf16.msra.mxu0 0
          %2023 = vmatpush.bf16.msra.mxu0 0
          %2024 = vmatpush.bf16.msra.mxu0 0
          %2025 = vmatpush.bf16.msra.mxu0 0
          %2026 = vmatpush.bf16.msra.mxu0 0
          %2027 = vmatpush.bf16.msra.mxu0 %v2015
          %2028 = vmatpush.bf16.msra.mxu0 %v2014
          %2029 = vmatmul.bf16.gmra.mxu0 %v2019
          %v2030 = vpop.f32.mrf.mxu0
          %v2031 = vadd.f32 0.0, %v2030
          %v2032 = vpop.f32.mrf.mxu0
          %v2033 = vadd.f32 0.0, %v2032
          %2034 = vdwg.mxu0
          %v2035 = vld [vmem:[#allocation8] sm:$0xff]
          %v2036 = vld [vmem:[#allocation8 + $0x8] sm:$0xff]
          %v2037 = vadd.f32 %v1929, %v1963
          %v2038 = vadd.f32 %v2037, %v1997
          %v2039 = vadd.f32 %v2038, %v2031
          %v2040 = vadd.f32 %v1931, %v1965
          %v2041 = vadd.f32 %v2040, %v1999
          %v2042 = vadd.f32 %v2041, %v2033
          %v2043 = vadd.f32 %v2035, %v2039
          %v2044 = vadd.f32 %v2036, %v2042
          %v2045 = vld [vmem:[%s9] sm:$0x1]
          %v2047 = vperm.slane %v2045, 0
          %v2049 = vadd.f32 %v2043, %v2047
          %v2050 = vadd.f32 %v2044, %v2047
          %2051 = vadd.xlane.f32.xlu0 %v2049
          %v2052 = vpop.xlane.xlu0 %2051
          %2053 = vadd.xlane.f32.xlu0 %v2050
          %v2054 = vpop.xlane.xlu0 %2053
          %v2055 = vrcp.pop 128.0
          %v2056 = vmul.f32 128.0, %v2055
          %v2057 = vsub.f32 1.0, %v2056
          %v2058 = vmul.f32 %v2055, %v2057
          %v2059 = vadd.f32 %v2055, %v2058
          %vm2060 = vweird.f32 %v2055
          %v2061 = vsel %vm2060, %v2055, %v2059
          %v2062 = vmul.f32 %v2052, %v2061
          %v2063 = vmul.f32 %v2054, %v2061
          %v2064 = vsub.f32 %v2049, %v2062
          %v2065 = vsub.f32 %v2050, %v2063
          %v2066 = vmul.f32 %v2064, %v2064
          %v2067 = vmul.f32 %v2065, %v2065
          %2068 = vadd.xlane.f32.xlu0 %v2066
          %v2069 = vpop.xlane.xlu0 %2068
          %2070 = vadd.xlane.f32.xlu0 %v2067
          %v2071 = vpop.xlane.xlu0 %2070
          %v2072 = vmul.f32 %v2069, %v2061
          %v2073 = vmul.f32 %v2071, %v2061
          %v2074 = vadd.f32 %v2072, 1e-05
          %v2075 = vadd.f32 %v2073, 1e-05
          %v2076 = vrsqrt.pop %v2074
          %v2077 = vmul.f32 %v2076, %v2074
          %v2078 = vmul.f32 %v2077, %v2076
          %v2079 = vmul.f32 0.5, %v2078
          %v2080 = vsub.f32 1.5, %v2079
          %v2081 = vmul.f32 %v2076, %v2080
          %vm2082 = vweird.f32 %v2074
          %vm2083 = vweird.f32 %v2076
          %vm2084 = vmor %vm2082, %vm2083
          %v2085 = vsel %vm2084, %v2076, %v2081
          %v2086 = vrsqrt.pop %v2075
          %v2087 = vmul.f32 %v2086, %v2075
          %v2088 = vmul.f32 %v2087, %v2086
          %v2089 = vmul.f32 0.5, %v2088
          %v2090 = vsub.f32 1.5, %v2089
          %v2091 = vmul.f32 %v2086, %v2090
          %vm2092 = vweird.f32 %v2075
          %vm2093 = vweird.f32 %v2086
          %vm2094 = vmor %vm2092, %vm2093
          %v2095 = vsel %vm2094, %v2086, %v2091
          %v2096 = vmul.f32 %v2064, %v2085
          %v2097 = vmul.f32 %v2065, %v2095
          %v2098 = vld [vmem:[%s10] sm:$0x1]
          %v2100 = vperm.slane %v2098, 0
          %v2102 = vmul.f32 %v2096, %v2100
          %v2103 = vmul.f32 %v2097, %v2100
          %v2104 = vld [vmem:[%s11] sm:$0x1]
          %v2106 = vperm.slane %v2104, 0
          %v2108 = vadd.f32 %v2102, %v2106
          %v2109 = vadd.f32 %v2103, %v2106
          %2110 = vst [vmem:[%s651] sm:$0xff] %v2108
          %2111 = vst [vmem:[%s651 + $0x8] sm:$0xff] %v2109
        $region141: #{tpu_custom_call.1} parent=104 // pred_fallthru
          _
        %s2112 = sand.u32 %s313, 1
        %s2113 = scalar_lea.sflag [#allocation7], %s2112
        %s2114 = sand.u32 %s313, 1
        %s2115 = smul.addr %s2114, 16
        %s2116 = scalar_lea.vmem [#allocation16], %s2115
        // Predicated region
        $region142: #{tpu_custom_call.1} parent=104 // pred_check
          %p2117 = pneg %p323
        $region143: #{tpu_custom_call.1} parent=104 // pred_check_branch
          %2119 = sbr.rel (%p2117) target = $region145
        $region144: #{tpu_custom_call.1} parent=104 // pred_region
          %2121 = vsyncadd %s2113, 0
          %s2122 = smul.addr %s33, 2
          %s2123 = smul.addr %s2122, 8
          %s2124 = scalar_lea.hbm %s12, %s2123
          %s2125 = sshll.u32 %s2116, 4
          %s2126 = int_to_ptr.vmem [resolvable:$true] %s2125
          %s2127 = sshll.u32 %s2124, 4
          %s2128 = int_to_ptr.hbm [resolvable:$true] %s2127
          %2133 = dma.vmem_to_hbm [thread:$0]  %s2126, 256, %s2128, %s2113, 128, 128, 8
        $region145: #{tpu_custom_call.1} parent=104 // pred_fallthru
          _
      $region105: #{tpu_custom_call.1} parent=5 // pred_fallthru
        _
      %p2134 = scmp.le.s32.totalorder 2, %s24
      // Predicated region
      $region146: #{tpu_custom_call.1} parent=5 // pred_check
        %p2135 = pneg %p2134
      $region147: #{tpu_custom_call.1} parent=5 // pred_check_branch
        %2137 = sbr.rel (%p2135) target = $region149
      $region148: #{tpu_custom_call.1} parent=5 // pred_region
        %s2138 = ssub.s32 %s24, 2
        // Predicated region
        $region150: #{tpu_custom_call.1} parent=148 // pred_check
          %p2139 = pneg %p329
        $region151: #{tpu_custom_call.1} parent=148 // pred_check_branch
          %2141 = sbr.rel (%p2139) target = $region153
        $region152: #{tpu_custom_call.1} parent=148 // pred_region
          %s2142 = sand.u32 %s314, 1
          %s2143 = scalar_lea.sflag [#allocation7], %s2142
          %s2144 = sand.u32 %s314, 1
          %s2145 = smul.addr %s2144, 16
          %s2146 = scalar_lea.vmem [#allocation16], %s2145
          %2148 = dma.done %s2143, 256
        $region153: #{tpu_custom_call.1} parent=148 // pred_fallthru
          _
      $region149: #{tpu_custom_call.1} parent=5 // pred_fallthru
        _
    $region6: #{tpu_custom_call.1} parent=1 // loop_footer
      %s28 = sadd.s32 1, %s24
    $region7: #{tpu_custom_call.1} parent=1 // loop_footer_branch
      %23 = sbr.rel target = $region3
    $region8: #{tpu_custom_call.1} parent=1 // loop_exit
      _
    %2149 = vsyncpa [#allocation6], 1
    %s2150 = scalar_lea.sflag [#allocation6], 1
    %2151 = vsyncpa %s2150, 1
    %2152 = vsyncpa [#allocation9], 1
    %2153 = vsyncpa [#allocation14], 1
    %2154 = vsyncpa [#allocation7], 1
    %s2155 = scalar_lea.sflag [#allocation7], 1
    %2156 = vsyncpa %s2155, 1

</llo_original>
